<compile_context>
chip_gen: v7x
topology: tpu7x:2x2x1
jax: 0.10.0
libtpu: 0.0.40
codegen_flags: <defaults>
</compile_context>

<pallas_src>
import math

import jax
import jax.numpy as jnp
from jax.experimental import pallas as pl
from jax.experimental.pallas import tpu as pltpu


def _attn_pool_kernel(x_ref, mask_ref, w1t_ref, b1_ref, w2_ref,
                      pooled_ref, m_sc, l_sc):
    # x_ref:      (bt, St, D_in)  input dtype (cast to bf16 in-kernel for the MXU)
    # mask_ref:   (bt, St)        f32 {0, 1}
    # w1t_ref:    (D_in, H)       bf16  first input_proj linear (transposed)
    # b1_ref:     (1, H)          f32
    # w2_ref:     (1, H)          f32   second input_proj linear as a row (no bias)
    # pooled_ref: (bt, D_in)      f32   sum_s softmax(score)_s * x_s  (resident across S tiles)
    # m_sc, l_sc: (bt, 1)         f32   online-softmax running max / denominator
    bt, st, d_in = x_ref.shape
    h_dim = w1t_ref.shape[1]
    si = pl.program_id(1)

    @pl.when(si == 0)
    def _():
        m_sc[...] = jnp.full_like(m_sc, -jnp.inf)
        l_sc[...] = jnp.zeros_like(l_sc)
        pooled_ref[...] = jnp.zeros_like(pooled_ref)

    x_bf = x_ref[...].astype(jnp.bfloat16)                       # [bt, St, D_in]

    # h = tanh(x @ W1^T + b1): tall-M bf16 MXU matmul, f32 accumulation, tanh on EUP.
    # TODO(synk): on v6e/v7x a bf16 tanh roughly doubles EUP throughput if EUP is the
    # binding slot (must stay f32 on v5e).
    h = jnp.tanh(
        jnp.dot(x_bf.reshape(bt * st, d_in), w1t_ref[...],
                preferred_element_type=jnp.float32)
        + b1_ref[...])                                           # [bt*St, H] f32

    # score = h @ w2 as a VPU multiply + lane reduce, lane-dense [bt, St].
    # TODO(synk): if the bundle shows the XLU saturating here, switch to an N=1 MXU
    # matmul instead (MXU generally has headroom in this kernel).
    score = jnp.sum(h.reshape(bt, st, h_dim) * w2_ref[...], axis=-1)

    m = mask_ref[...]                                            # [bt, St] f32
    score = score * m + (-10000.0) * (1.0 - m)

    # Online softmax across S tiles.
    m_prev = m_sc[...]
    m_new = jnp.maximum(m_prev, jnp.max(score, axis=-1, keepdims=True))
    alpha = jnp.exp(m_prev - m_new)                              # [bt, 1]
    p = jnp.exp(score - m_new)                                   # [bt, St]
    l_sc[...] = alpha * l_sc[...] + jnp.sum(p, axis=-1, keepdims=True)
    m_sc[...] = m_new

    # Weighted-x accumulation on the MXU (bf16 inputs, f32 accumulation) — avoids
    # materializing a [bt, St, D_in] f32 temp and frees VPU/XLU/vst slots.
    px = jnp.einsum("bqs,bsd->bqd", p[:, None, :].astype(jnp.bfloat16), x_bf,
                    preferred_element_type=jnp.float32)[:, 0, :]
    pooled_ref[...] = alpha * pooled_ref[...] + px

    @pl.when(si == pl.num_programs(1) - 1)
    def _():
        # Approx reciprocal (EUP) only perturbs the pooled scale slightly; the output
        # bias is applied exactly in the hoisted projection since sum_s p_s == 1.
        pooled_ref[...] = pooled_ref[...] * pl.reciprocal(l_sc[...], approx=True)


def _vmem_budget_bytes():
    cap = 64 << 20                      # conservative default: v7x per-TensorCore VMEM
    try:
        info_cap = int(pltpu.get_tpu_info().vmem_capacity_bytes)
        if info_cap >= (32 << 20):
            cap = info_cap              # 128 MiB on v5e/v6e, 64 MiB on v7x
    except Exception:
        pass
    return (cap * 3) // 4               # leave headroom for compiler scratch


def _choose_tiles(B, S, D_in, H, x_itemsize, budget_bytes):
    """Largest multiple-of-8 batch tile (and, if needed, a multiple-of-128 S tile)
    that fits the per-generation VMEM budget."""
    b_ceil8 = max(8, ((B + 7) // 8) * 8)

    def step_bytes(bt, st):
        x_tile = 2 * bt * st * D_in * x_itemsize     # double-buffered x tile
        m_tile = 2 * bt * st * 4                     # double-buffered mask tile
        o_tile = 2 * bt * D_in * 4                   # pooled accumulator block
        temps = bt * st * (2 * D_in + 5 * H)         # bf16 x copy + f32 h + slack
        consts = 2 * (D_in * H * 2 + 2 * H * 4)      # weights (worst case: 2x-buffered)
        scratch = 4 * bt * 4
        return x_tile + m_tile + o_tile + temps + consts + scratch

    bt = min(b_ceil8, 512)
    # Keep >= 2 batch-grid steps when the batch allows it (v7x has 2 TensorCores).
    if b_ceil8 >= 16:
        bt = min(bt, max(8, ((b_ceil8 // 2) // 8) * 8))
    st = S
    while bt > 8 and step_bytes(bt, st) > budget_bytes:
        bt -= 8
    if step_bytes(bt, st) > budget_bytes and S >= 256:
        # S-tiling (online softmax path): largest multiple-of-128 divisor of S that fits.
        for k in range(S // 128, 0, -1):
            cand = k * 128
            if S % cand == 0 and step_bytes(bt, cand) <= budget_bytes:
                st = cand
                break
    return bt, st


def attn_pooling(x, mask, w1t, b1, w2_row, wot=None, bo=None):
    """x: [B, S, D_in]; mask: [B, S, 1] or [B, S]; weights pre-transposed:
    w1t [D_in, H], b1 [H], w2_row [1, H] or [H], wot [D_in, D_out] or None, bo [D_out]."""
    B, S, D_in = x.shape
    H = w1t.shape[1]

    if mask.ndim == 3:
        mask = mask[..., 0]                          # lane-dense [B, S] mask
    mask = mask.astype(jnp.float32)

    w1t_bf = w1t.astype(jnp.bfloat16)
    b1 = jnp.asarray(b1, jnp.float32).reshape(1, H)
    w2_row = jnp.asarray(w2_row, jnp.float32).reshape(1, H)

    budget = _vmem_budget_bytes()
    bt, st = _choose_tiles(B, S, D_in, H, x.dtype.itemsize, budget)

    b_pad = pl.cdiv(B, bt) * bt
    if b_pad != B:
        # Only when B is not a multiple of bt (bt is a multiple of 8).  Padded rows have
        # mask == 0 and x == 0 -> pooled == 0; they are sliced off below.
        x = jnp.pad(x, ((0, b_pad - B), (0, 0), (0, 0)))
        mask = jnp.pad(mask, ((0, b_pad - B), (0, 0)))

    def build(weight_pipeline_mode):
        def const_spec(shape):
            if weight_pipeline_mode is None:
                return pl.BlockSpec(shape, lambda b, s: (0, 0))
            return pl.BlockSpec(shape, lambda b, s: (0, 0),
                                pipeline_mode=weight_pipeline_mode)

        return pl.pallas_call(
            _attn_pool_kernel,
            out_shape=jax.ShapeDtypeStruct((b_pad, D_in), jnp.float32),
            grid_spec=pltpu.PrefetchScalarGridSpec(
                num_scalar_prefetch=0,
                grid=(b_pad // bt, S // st),
                in_specs=[
                    pl.BlockSpec((bt, st, D_in), lambda b, s: (b, s, 0)),
                    pl.BlockSpec((bt, st), lambda b, s: (b, s)),
                    const_spec((D_in, H)),
                    const_spec((1, H)),
                    const_spec((1, H)),
                ],
                out_specs=pl.BlockSpec((bt, D_in), lambda b, s: (b, 0)),
                scratch_shapes=[pltpu.VMEM((bt, 1), jnp.float32),
                                pltpu.VMEM((bt, 1), jnp.float32)],
            ),
            compiler_params=pltpu.CompilerParams(
                dimension_semantics=("parallel", "arbitrary"),
                vmem_limit_bytes=int(budget),
            ),
        )

    args = (x, mask, w1t_bf, b1, w2_row)
    try:
        # Constant-index weights are fetched once -> single-buffer them to free VMEM.
        pooled = build(pl.Buffered(1))(*args)
    except Exception:
        pooled = build(None)(*args)     # fallback if pipeline_mode is unsupported
    pooled = pooled[:B]

    if wot is None:
        return pooled                    # output_proj absent -> identity in the module

    D_out = wot.shape[1]
    bo = jnp.asarray(bo, jnp.float32).reshape(1, D_out)
    # Hoisted output projection: one M=B matmul (lane-dense when D_out % 128 == 0).
    return (jnp.dot(pooled.astype(jnp.bfloat16), wot.astype(jnp.bfloat16),
                    preferred_element_type=jnp.float32) + bo)


def _weight_norm_effective(v):
    # nn.utils.weight_norm: W = g * v / ||v||_row with g initialized to ||v||_row.
    norm = jnp.sqrt(jnp.sum(v * v, axis=1, keepdims=True))
    return norm * v / norm


def _reference(x, mask, w1t, b1, w2_row, wot, bo):
    # Unfused reference (exact softmax, full feature matmul).
    h = jnp.tanh(jnp.einsum("bsd,dh->bsh", x, w1t) + b1)
    score = jnp.einsum("bsh,h->bs", h, w2_row.reshape(-1))[..., None]    # [B, S, 1]
    score = score * mask + (-10000.0) * (1.0 - mask)
    p = jax.nn.softmax(score, axis=1)                                    # [B, S, 1]
    feat = jnp.einsum("bsd,de->bse", x, wot) + bo
    return jnp.einsum("bs,bse->be", p[..., 0], feat)


if __name__ == "__main__":
    key = jax.random.PRNGKey(0)
    B, S = 4, 8
    input_size, hidden_size, output_size = 32, 32, 32

    ks = jax.random.split(key, 6)

    # Deterministic synthetic parameters mirroring LinearProjection.__init__
    # (activation='linear' -> coeff 1.0, std = sqrt(1/in_features)).
    w1_v = jax.random.normal(ks[0], (hidden_size, input_size), jnp.float32) * math.sqrt(1.0 / input_size)
    b1 = jnp.zeros((hidden_size,), jnp.float32)
    w2_v = jax.random.normal(ks[1], (1, hidden_size), jnp.float32) * math.sqrt(1.0 / hidden_size)
    wo_v = jax.random.normal(ks[2], (output_size, input_size), jnp.float32) * math.sqrt(1.0 / input_size)
    bo = jnp.zeros((output_size,), jnp.float32)

    # weight_norm effective weights (identity at init, computed explicitly).
    w1 = _weight_norm_effective(w1_v)
    w2 = _weight_norm_effective(w2_v)
    wo = _weight_norm_effective(wo_v)

    # Pre-transpose for row-major matmuls in-kernel.
    w1t = jnp.transpose(w1)          # [D_in, H]
    w2_row = w2                      # [1, H]
    wot = jnp.transpose(wo)          # [D_in, D_out]

    # Inputs: binary mask with some padded positions.
    x = jax.random.normal(ks[3], (B, S, input_size), jnp.float32)
    mask = jnp.ones((B, S, 1), jnp.float32)
    mask = mask.at[1, S - 2:, 0].set(0.0)
    mask = mask.at[3, S - 3:, 0].set(0.0)

    out = attn_pooling(x, mask, w1t, b1, w2_row, wot, bo)
    out = jax.block_until_ready(out)

    # Reference uses the same bf16-rounded operands the kernel feeds the MXU.
    x_r = x.astype(jnp.bfloat16).astype(jnp.float32)
    w1t_r = w1t.astype(jnp.bfloat16).astype(jnp.float32)
    wot_r = wot.astype(jnp.bfloat16).astype(jnp.float32)
    ref = _reference(x_r, mask, w1t_r, b1.reshape(1, -1), w2_row, wot_r, bo.reshape(1, -1))

    assert out.shape == (B, output_size)
    err = jnp.max(jnp.abs(out - ref))
    assert jnp.allclose(out, ref, atol=2e-2, rtol=2e-2), f"max abs err {err}"

    print("KERNEL_OK")
</pallas_src>

<mosaic_0001>
module attributes {stable_mosaic.version = 11 : i64} {
  func.func @_attn_pool_kernel(%arg0: i32, %arg1: i32, %arg2: memref<8x8x32xf32, #tpu.memory_space<vmem>>, %arg3: memref<8x8xf32, #tpu.memory_space<vmem>>, %arg4: memref<32x32xbf16, #tpu.memory_space<vmem>>, %arg5: memref<1x32xf32, #tpu.memory_space<vmem>>, %arg6: memref<1x32xf32, #tpu.memory_space<vmem>>, %arg7: memref<8x32xf32, #tpu.memory_space<vmem>>, %arg8: memref<8x1xf32, #tpu.memory_space<vmem>>, %arg9: memref<8x1xf32, #tpu.memory_space<vmem>>) attributes {dimension_semantics = [#tpu.dimension_semantics<parallel>, #tpu.dimension_semantics<arbitrary>], iteration_bounds = array<i64: 1, 1>, scalar_prefetch = 0 : i64, scratch_operands = 2 : i64, tpu.core_type = #tpu.core_type<tc>, window_params = [{transform_indices = @transform_0, window_bounds = array<i64: 8, 8, 32>}, {transform_indices = @transform_1, window_bounds = array<i64: 8, 8>}, {pipeline_mode = #tpu.pipeline_mode<synchronous>, transform_indices = @transform_2, window_bounds = array<i64: 32, 32>}, {pipeline_mode = #tpu.pipeline_mode<synchronous>, transform_indices = @transform_3, window_bounds = array<i64: 1, 32>}, {pipeline_mode = #tpu.pipeline_mode<synchronous>, transform_indices = @transform_4, window_bounds = array<i64: 1, 32>}, {transform_indices = @transform_5, window_bounds = array<i64: 8, 32>}]} {
    %c0_i32 = arith.constant 0 : i32
    %0 = arith.cmpi eq, %arg1, %c0_i32 : i32
    %1 = arith.extui %0 : i1 to i32
    %c0_i32_0 = arith.constant 0 : i32
    %2 = arith.cmpi ne, %1, %c0_i32_0 : i32
    scf.if %2 {
      %cst_31 = arith.constant 0xFF800000 : f32
      %53 = vector.broadcast %cst_31 : f32 to vector<8x1xf32>
      %c0_32 = arith.constant 0 : index
      %c0_33 = arith.constant 0 : index
      %54 = vector.load %arg8[%c0_32, %c0_33] : memref<8x1xf32, #tpu.memory_space<vmem>>, vector<8x1xf32>
      tpu.vector_store %arg8[%c0_32, %c0_33], %53 {strides = array<i32>} : memref<8x1xf32, #tpu.memory_space<vmem>>, vector<8x1xf32>,
      %cst_34 = arith.constant 0.000000e+00 : f32
      %55 = vector.broadcast %cst_34 : f32 to vector<8x1xf32>
      %c0_35 = arith.constant 0 : index
      %c0_36 = arith.constant 0 : index
      %56 = vector.load %arg9[%c0_35, %c0_36] : memref<8x1xf32, #tpu.memory_space<vmem>>, vector<8x1xf32>
      tpu.vector_store %arg9[%c0_35, %c0_36], %55 {strides = array<i32>} : memref<8x1xf32, #tpu.memory_space<vmem>>, vector<8x1xf32>,
      %cst_37 = arith.constant 0.000000e+00 : f32
      %57 = vector.broadcast %cst_37 : f32 to vector<8x32xf32>
      %c0_38 = arith.constant 0 : index
      %c0_39 = arith.constant 0 : index
      %58 = vector.load %arg7[%c0_38, %c0_39] : memref<8x32xf32, #tpu.memory_space<vmem>>, vector<8x32xf32>
      tpu.vector_store %arg7[%c0_38, %c0_39], %57 {strides = array<i32>} : memref<8x32xf32, #tpu.memory_space<vmem>>, vector<8x32xf32>,
    } else {
    }
    %c0 = arith.constant 0 : index
    %c0_1 = arith.constant 0 : index
    %c0_2 = arith.constant 0 : index
    %3 = vector.load %arg2[%c0, %c0_1, %c0_2] : memref<8x8x32xf32, #tpu.memory_space<vmem>>, vector<8x8x32xf32>
    %4 = arith.truncf %3 : vector<8x8x32xf32> to vector<8x8x32xbf16>
    %5 = vector.shape_cast %4 : vector<8x8x32xbf16> to vector<64x32xbf16>
    %c0_3 = arith.constant 0 : index
    %c0_4 = arith.constant 0 : index
    %6 = vector.load %arg4[%c0_3, %c0_4] : memref<32x32xbf16, #tpu.memory_space<vmem>>, vector<32x32xbf16>
    %cst = arith.constant dense<0.000000e+00> : vector<64x32xf32>
    %7 = tpu.matmul %5, %6, %cst {dimension_numbers = #tpu.dot_dimension_numbers<[1], [0], [0], [1], [0, 0, 1, 1], [], []>} : vector<64x32xbf16>, vector<32x32xbf16>, vector<64x32xf32> -> vector<64x32xf32>
    %c0_5 = arith.constant 0 : index
    %c0_6 = arith.constant 0 : index
    %8 = vector.load %arg5[%c0_5, %c0_6] : memref<1x32xf32, #tpu.memory_space<vmem>>, vector<1x32xf32>
    %9 = vector.broadcast %8 : vector<1x32xf32> to vector<64x32xf32>
    %10 = arith.addf %7, %9 : vector<64x32xf32>
    %11 = math.tanh %10 : vector<64x32xf32>
    %12 = vector.shape_cast %11 : vector<64x32xf32> to vector<8x8x32xf32>
    %c0_7 = arith.constant 0 : index
    %c0_8 = arith.constant 0 : index
    %13 = vector.load %arg6[%c0_7, %c0_8] : memref<1x32xf32, #tpu.memory_space<vmem>>, vector<1x32xf32>
    %14 = vector.shape_cast %13 : vector<1x32xf32> to vector<1x1x32xf32>
    %15 = vector.broadcast %14 : vector<1x1x32xf32> to vector<8x8x32xf32>
    %16 = arith.mulf %12, %15 : vector<8x8x32xf32>
    %cst_9 = arith.constant dense<0.000000e+00> : vector<8x8xf32>
    %17 = vector.multi_reduction <add>, %16, %cst_9 [2] : vector<8x8x32xf32> to vector<8x8xf32>
    %c0_10 = arith.constant 0 : index
    %c0_11 = arith.constant 0 : index
    %18 = vector.load %arg3[%c0_10, %c0_11] : memref<8x8xf32, #tpu.memory_space<vmem>>, vector<8x8xf32>
    %19 = arith.mulf %17, %18 : vector<8x8xf32>
    %cst_12 = arith.constant 1.000000e+00 : f32
    %20 = vector.broadcast %cst_12 : f32 to vector<8x8xf32>
    %21 = arith.subf %20, %18 : vector<8x8xf32>
    %cst_13 = arith.constant -1.000000e+04 : f32
    %22 = vector.broadcast %cst_13 : f32 to vector<8x8xf32>
    %23 = arith.mulf %22, %21 : vector<8x8xf32>
    %24 = arith.addf %19, %23 : vector<8x8xf32>
    %c0_14 = arith.constant 0 : index
    %c0_15 = arith.constant 0 : index
    %25 = vector.load %arg8[%c0_14, %c0_15] : memref<8x1xf32, #tpu.memory_space<vmem>>, vector<8x1xf32>
    %cst_16 = arith.constant dense<0xFF800000> : vector<8xf32>
    %26 = vector.multi_reduction <maximumf>, %24, %cst_16 [1] : vector<8x8xf32> to vector<8xf32>
    %27 = vector.shape_cast %26 : vector<8xf32> to vector<8x1xf32>
    %28 = arith.maximumf %25, %27 : vector<8x1xf32>
    %29 = arith.subf %25, %28 : vector<8x1xf32>
    %30 = math.exp %29 : vector<8x1xf32>
    %31 = vector.broadcast %28 : vector<8x1xf32> to vector<8x8xf32>
    %32 = arith.subf %24, %31 : vector<8x8xf32>
    %33 = math.exp %32 : vector<8x8xf32>
    %c0_17 = arith.constant 0 : index
    %c0_18 = arith.constant 0 : index
    %34 = vector.load %arg9[%c0_17, %c0_18] : memref<8x1xf32, #tpu.memory_space<vmem>>, vector<8x1xf32>
    %35 = arith.mulf %30, %34 : vector<8x1xf32>
    %cst_19 = arith.constant dense<0.000000e+00> : vector<8xf32>
    %36 = vector.multi_reduction <add>, %33, %cst_19 [1] : vector<8x8xf32> to vector<8xf32>
    %37 = vector.shape_cast %36 : vector<8xf32> to vector<8x1xf32>
    %38 = arith.addf %35, %37 : vector<8x1xf32>
    %c0_20 = arith.constant 0 : index
    %c0_21 = arith.constant 0 : index
    %39 = vector.load %arg9[%c0_20, %c0_21] : memref<8x1xf32, #tpu.memory_space<vmem>>, vector<8x1xf32>
    tpu.vector_store %arg9[%c0_20, %c0_21], %38 {strides = array<i32>} : memref<8x1xf32, #tpu.memory_space<vmem>>, vector<8x1xf32>,
    %c0_22 = arith.constant 0 : index
    %c0_23 = arith.constant 0 : index
    %40 = vector.load %arg8[%c0_22, %c0_23] : memref<8x1xf32, #tpu.memory_space<vmem>>, vector<8x1xf32>
    tpu.vector_store %arg8[%c0_22, %c0_23], %28 {strides = array<i32>} : memref<8x1xf32, #tpu.memory_space<vmem>>, vector<8x1xf32>,
    %41 = vector.shape_cast %33 : vector<8x8xf32> to vector<8x1x8xf32>
    %42 = arith.truncf %41 : vector<8x1x8xf32> to vector<8x1x8xbf16>
    "tpu.trace_start"() <{level = 10 : i32, message = "bqs,bsd->bqd"}> : () -> ()
    %cst_24 = arith.constant dense<0.000000e+00> : vector<8x1x32xf32>
    %43 = tpu.matmul %42, %4, %cst_24 {dimension_numbers = #tpu.dot_dimension_numbers<[2], [1], [1], [2], [0, 0, 0, 1, 1, 2], [0], [0]>} : vector<8x1x8xbf16>, vector<8x8x32xbf16>, vector<8x1x32xf32> -> vector<8x1x32xf32>
    "tpu.trace_stop"() : () -> ()
    %44 = vector.shape_cast %43 : vector<8x1x32xf32> to vector<8x32xf32>
    %c0_25 = arith.constant 0 : index
    %c0_26 = arith.constant 0 : index
    %45 = vector.load %arg7[%c0_25, %c0_26] : memref<8x32xf32, #tpu.memory_space<vmem>>, vector<8x32xf32>
    %46 = vector.broadcast %30 : vector<8x1xf32> to vector<8x32xf32>
    %47 = arith.mulf %46, %45 : vector<8x32xf32>
    %48 = arith.addf %47, %44 : vector<8x32xf32>
    %c0_27 = arith.constant 0 : index
    %c0_28 = arith.constant 0 : index
    %49 = vector.load %arg7[%c0_27, %c0_28] : memref<8x32xf32, #tpu.memory_space<vmem>>, vector<8x32xf32>
    tpu.vector_store %arg7[%c0_27, %c0_28], %48 {strides = array<i32>} : memref<8x32xf32, #tpu.memory_space<vmem>>, vector<8x32xf32>,
    %c0_i32_29 = arith.constant 0 : i32
    %50 = arith.cmpi eq, %arg1, %c0_i32_29 : i32
    %51 = arith.extui %50 : i1 to i32
    %c0_i32_30 = arith.constant 0 : i32
    %52 = arith.cmpi ne, %51, %c0_i32_30 : i32
    scf.if %52 {
      %c0_31 = arith.constant 0 : index
      %c0_32 = arith.constant 0 : index
      %53 = vector.load %arg7[%c0_31, %c0_32] : memref<8x32xf32, #tpu.memory_space<vmem>>, vector<8x32xf32>
      %c0_33 = arith.constant 0 : index
      %c0_34 = arith.constant 0 : index
      %54 = vector.load %arg9[%c0_33, %c0_34] : memref<8x1xf32, #tpu.memory_space<vmem>>, vector<8x1xf32>
      %55 = tpu.reciprocal %54 {approx = true} : vector<8x1xf32> -> vector<8x1xf32>
      %56 = vector.broadcast %55 : vector<8x1xf32> to vector<8x32xf32>
      %57 = arith.mulf %53, %56 : vector<8x32xf32>
      %c0_35 = arith.constant 0 : index
      %c0_36 = arith.constant 0 : index
      %58 = vector.load %arg7[%c0_35, %c0_36] : memref<8x32xf32, #tpu.memory_space<vmem>>, vector<8x32xf32>
      tpu.vector_store %arg7[%c0_35, %c0_36], %57 {strides = array<i32>} : memref<8x32xf32, #tpu.memory_space<vmem>>, vector<8x32xf32>,
    } else {
    }
    return
  }
  func.func @transform_0(%arg0: i32, %arg1: i32) -> (i32, i32, i32) {
    %c0_i32 = arith.constant 0 : i32
    %c0_i32_0 = arith.constant 0 : i32
    return %arg0, %arg1, %c0_i32 : i32, i32, i32
  }
  func.func @transform_1(%arg0: i32, %arg1: i32) -> (i32, i32) {
    %c0_i32 = arith.constant 0 : i32
    return %arg0, %arg1 : i32, i32
  }
  func.func @transform_2(%arg0: i32, %arg1: i32) -> (i32, i32) {
    %c0_i32 = arith.constant 0 : i32
    %c0_i32_0 = arith.constant 0 : i32
    %c0_i32_1 = arith.constant 0 : i32
    return %c0_i32, %c0_i32_0 : i32, i32
  }
  func.func @transform_3(%arg0: i32, %arg1: i32) -> (i32, i32) {
    %c0_i32 = arith.constant 0 : i32
    %c0_i32_0 = arith.constant 0 : i32
    %c0_i32_1 = arith.constant 0 : i32
    return %c0_i32, %c0_i32_0 : i32, i32
  }
  func.func @transform_4(%arg0: i32, %arg1: i32) -> (i32, i32) {
    %c0_i32 = arith.constant 0 : i32
    %c0_i32_0 = arith.constant 0 : i32
    %c0_i32_1 = arith.constant 0 : i32
    return %c0_i32, %c0_i32_0 : i32, i32
  }
  func.func @transform_5(%arg0: i32, %arg1: i32) -> (i32, i32) {
    %c0_i32 = arith.constant 0 : i32
    %c0_i32_0 = arith.constant 0 : i32
    return %arg0, %c0_i32 : i32, i32
  }
}

module attributes {stable_mosaic.version = 11 : i64} {
  func.func @_attn_pool_kernel(%arg0: i32, %arg1: i32, %arg2: memref<8x8x32xf32, #tpu.memory_space<vmem>>, %arg3: memref<8x8xf32, #tpu.memory_space<vmem>>, %arg4: memref<32x32xbf16, #tpu.memory_space<vmem>>, %arg5: memref<1x32xf32, #tpu.memory_space<vmem>>, %arg6: memref<1x32xf32, #tpu.memory_space<vmem>>, %arg7: memref<8x32xf32, #tpu.memory_space<vmem>>, %arg8: memref<8x1xf32, #tpu.memory_space<vmem>>, %arg9: memref<8x1xf32, #tpu.memory_space<vmem>>) attributes {dimension_semantics = [#tpu.dimension_semantics<parallel>, #tpu.dimension_semantics<arbitrary>], iteration_bounds = array<i64: 1, 1>, scalar_prefetch = 0 : i64, scratch_operands = 2 : i64, tpu.core_type = #tpu.core_type<tc>, window_params = [{transform_indices = @transform_0, window_bounds = array<i64: 8, 8, 32>}, {transform_indices = @transform_1, window_bounds = array<i64: 8, 8>}, {pipeline_mode = #tpu.pipeline_mode<synchronous>, transform_indices = @transform_2, window_bounds = array<i64: 32, 32>}, {pipeline_mode = #tpu.pipeline_mode<synchronous>, transform_indices = @transform_3, window_bounds = array<i64: 1, 32>}, {pipeline_mode = #tpu.pipeline_mode<synchronous>, transform_indices = @transform_4, window_bounds = array<i64: 1, 32>}, {transform_indices = @transform_5, window_bounds = array<i64: 8, 32>}]} {
    %c0_i32 = arith.constant 0 : i32
    %0 = arith.cmpi eq, %arg1, %c0_i32 : i32
    %1 = arith.extui %0 : i1 to i32
    %c0_i32_0 = arith.constant 0 : i32
    %2 = arith.cmpi ne, %1, %c0_i32_0 : i32
    scf.if %2 {
      %cst_31 = arith.constant 0xFF800000 : f32
      %53 = vector.broadcast %cst_31 : f32 to vector<8x1xf32>
      %c0_32 = arith.constant 0 : index
      %c0_33 = arith.constant 0 : index
      %54 = vector.load %arg8[%c0_32, %c0_33] : memref<8x1xf32, #tpu.memory_space<vmem>>, vector<8x1xf32>
      tpu.vector_store %arg8[%c0_32, %c0_33], %53 {strides = array<i32>} : memref<8x1xf32, #tpu.memory_space<vmem>>, vector<8x1xf32>,
      %cst_34 = arith.constant 0.000000e+00 : f32
      %55 = vector.broadcast %cst_34 : f32 to vector<8x1xf32>
      %c0_35 = arith.constant 0 : index
      %c0_36 = arith.constant 0 : index
      %56 = vector.load %arg9[%c0_35, %c0_36] : memref<8x1xf32, #tpu.memory_space<vmem>>, vector<8x1xf32>
      tpu.vector_store %arg9[%c0_35, %c0_36], %55 {strides = array<i32>} : memref<8x1xf32, #tpu.memory_space<vmem>>, vector<8x1xf32>,
      %cst_37 = arith.constant 0.000000e+00 : f32
      %57 = vector.broadcast %cst_37 : f32 to vector<8x32xf32>
      %c0_38 = arith.constant 0 : index
      %c0_39 = arith.constant 0 : index
      %58 = vector.load %arg7[%c0_38, %c0_39] : memref<8x32xf32, #tpu.memory_space<vmem>>, vector<8x32xf32>
      tpu.vector_store %arg7[%c0_38, %c0_39], %57 {strides = array<i32>} : memref<8x32xf32, #tpu.memory_space<vmem>>, vector<8x32xf32>,
    } else {
    }
    %c0 = arith.constant 0 : index
    %c0_1 = arith.constant 0 : index
    %c0_2 = arith.constant 0 : index
    %3 = vector.load %arg2[%c0, %c0_1, %c0_2] : memref<8x8x32xf32, #tpu.memory_space<vmem>>, vector<8x8x32xf32>
    %4 = arith.truncf %3 : vector<8x8x32xf32> to vector<8x8x32xbf16>
    %5 = vector.shape_cast %4 : vector<8x8x32xbf16> to vector<64x32xbf16>
    %c0_3 = arith.constant 0 : index
    %c0_4 = arith.constant 0 : index
    %6 = vector.load %arg4[%c0_3, %c0_4] : memref<32x32xbf16, #tpu.memory_space<vmem>>, vector<32x32xbf16>
    %cst = arith.constant dense<0.000000e+00> : vector<64x32xf32>
    %7 = tpu.matmul %5, %6, %cst {dimension_numbers = #tpu.dot_dimension_numbers<[1], [0], [0], [1], [0, 0, 1, 1], [], []>} : vector<64x32xbf16>, vector<32x32xbf16>, vector<64x32xf32> -> vector<64x32xf32>
    %c0_5 = arith.constant 0 : index
    %c0_6 = arith.constant 0 : index
    %8 = vector.load %arg5[%c0_5, %c0_6] : memref<1x32xf32, #tpu.memory_space<vmem>>, vector<1x32xf32>
    %9 = vector.broadcast %8 : vector<1x32xf32> to vector<64x32xf32>
    %10 = arith.addf %7, %9 : vector<64x32xf32>
    %11 = math.tanh %10 : vector<64x32xf32>
    %12 = vector.shape_cast %11 : vector<64x32xf32> to vector<8x8x32xf32>
    %c0_7 = arith.constant 0 : index
    %c0_8 = arith.constant 0 : index
    %13 = vector.load %arg6[%c0_7, %c0_8] : memref<1x32xf32, #tpu.memory_space<vmem>>, vector<1x32xf32>
    %14 = vector.shape_cast %13 : vector<1x32xf32> to vector<1x1x32xf32>
    %15 = vector.broadcast %14 : vector<1x1x32xf32> to vector<8x8x32xf32>
    %16 = arith.mulf %12, %15 : vector<8x8x32xf32>
    %cst_9 = arith.constant dense<0.000000e+00> : vector<8x8xf32>
    %17 = vector.multi_reduction <add>, %16, %cst_9 [2] : vector<8x8x32xf32> to vector<8x8xf32>
    %c0_10 = arith.constant 0 : index
    %c0_11 = arith.constant 0 : index
    %18 = vector.load %arg3[%c0_10, %c0_11] : memref<8x8xf32, #tpu.memory_space<vmem>>, vector<8x8xf32>
    %19 = arith.mulf %17, %18 : vector<8x8xf32>
    %cst_12 = arith.constant 1.000000e+00 : f32
    %20 = vector.broadcast %cst_12 : f32 to vector<8x8xf32>
    %21 = arith.subf %20, %18 : vector<8x8xf32>
    %cst_13 = arith.constant -1.000000e+04 : f32
    %22 = vector.broadcast %cst_13 : f32 to vector<8x8xf32>
    %23 = arith.mulf %22, %21 : vector<8x8xf32>
    %24 = arith.addf %19, %23 : vector<8x8xf32>
    %c0_14 = arith.constant 0 : index
    %c0_15 = arith.constant 0 : index
    %25 = vector.load %arg8[%c0_14, %c0_15] : memref<8x1xf32, #tpu.memory_space<vmem>>, vector<8x1xf32>
    %cst_16 = arith.constant dense<0xFF800000> : vector<8xf32>
    %26 = vector.multi_reduction <maximumf>, %24, %cst_16 [1] : vector<8x8xf32> to vector<8xf32>
    %27 = vector.shape_cast %26 : vector<8xf32> to vector<8x1xf32>
    %28 = arith.maximumf %25, %27 : vector<8x1xf32>
    %29 = arith.subf %25, %28 : vector<8x1xf32>
    %30 = math.exp %29 : vector<8x1xf32>
    %31 = vector.broadcast %28 : vector<8x1xf32> to vector<8x8xf32>
    %32 = arith.subf %24, %31 : vector<8x8xf32>
    %33 = math.exp %32 : vector<8x8xf32>
    %c0_17 = arith.constant 0 : index
    %c0_18 = arith.constant 0 : index
    %34 = vector.load %arg9[%c0_17, %c0_18] : memref<8x1xf32, #tpu.memory_space<vmem>>, vector<8x1xf32>
    %35 = arith.mulf %30, %34 : vector<8x1xf32>
    %cst_19 = arith.constant dense<0.000000e+00> : vector<8xf32>
    %36 = vector.multi_reduction <add>, %33, %cst_19 [1] : vector<8x8xf32> to vector<8xf32>
    %37 = vector.shape_cast %36 : vector<8xf32> to vector<8x1xf32>
    %38 = arith.addf %35, %37 : vector<8x1xf32>
    %c0_20 = arith.constant 0 : index
    %c0_21 = arith.constant 0 : index
    %39 = vector.load %arg9[%c0_20, %c0_21] : memref<8x1xf32, #tpu.memory_space<vmem>>, vector<8x1xf32>
    tpu.vector_store %arg9[%c0_20, %c0_21], %38 {strides = array<i32>} : memref<8x1xf32, #tpu.memory_space<vmem>>, vector<8x1xf32>,
    %c0_22 = arith.constant 0 : index
    %c0_23 = arith.constant 0 : index
    %40 = vector.load %arg8[%c0_22, %c0_23] : memref<8x1xf32, #tpu.memory_space<vmem>>, vector<8x1xf32>
    tpu.vector_store %arg8[%c0_22, %c0_23], %28 {strides = array<i32>} : memref<8x1xf32, #tpu.memory_space<vmem>>, vector<8x1xf32>,
    %41 = vector.shape_cast %33 : vector<8x8xf32> to vector<8x1x8xf32>
    %42 = arith.truncf %41 : vector<8x1x8xf32> to vector<8x1x8xbf16>
    "tpu.trace_start"() <{level = 10 : i32, message = "bqs,bsd->bqd"}> : () -> ()
    %cst_24 = arith.constant dense<0.000000e+00> : vector<8x1x32xf32>
    %43 = tpu.matmul %42, %4, %cst_24 {dimension_numbers = #tpu.dot_dimension_numbers<[2], [1], [1], [2], [0, 0, 0, 1, 1, 2], [0], [0]>} : vector<8x1x8xbf16>, vector<8x8x32xbf16>, vector<8x1x32xf32> -> vector<8x1x32xf32>
    "tpu.trace_stop"() : () -> ()
    %44 = vector.shape_cast %43 : vector<8x1x32xf32> to vector<8x32xf32>
    %c0_25 = arith.constant 0 : index
    %c0_26 = arith.constant 0 : index
    %45 = vector.load %arg7[%c0_25, %c0_26] : memref<8x32xf32, #tpu.memory_space<vmem>>, vector<8x32xf32>
    %46 = vector.broadcast %30 : vector<8x1xf32> to vector<8x32xf32>
    %47 = arith.mulf %46, %45 : vector<8x32xf32>
    %48 = arith.addf %47, %44 : vector<8x32xf32>
    %c0_27 = arith.constant 0 : index
    %c0_28 = arith.constant 0 : index
    %49 = vector.load %arg7[%c0_27, %c0_28] : memref<8x32xf32, #tpu.memory_space<vmem>>, vector<8x32xf32>
    tpu.vector_store %arg7[%c0_27, %c0_28], %48 {strides = array<i32>} : memref<8x32xf32, #tpu.memory_space<vmem>>, vector<8x32xf32>,
    %c0_i32_29 = arith.constant 0 : i32
    %50 = arith.cmpi eq, %arg1, %c0_i32_29 : i32
    %51 = arith.extui %50 : i1 to i32
    %c0_i32_30 = arith.constant 0 : i32
    %52 = arith.cmpi ne, %51, %c0_i32_30 : i32
    scf.if %52 {
      %c0_31 = arith.constant 0 : index
      %c0_32 = arith.constant 0 : index
      %53 = vector.load %arg7[%c0_31, %c0_32] : memref<8x32xf32, #tpu.memory_space<vmem>>, vector<8x32xf32>
      %c0_33 = arith.constant 0 : index
      %c0_34 = arith.constant 0 : index
      %54 = vector.load %arg9[%c0_33, %c0_34] : memref<8x1xf32, #tpu.memory_space<vmem>>, vector<8x1xf32>
      %55 = tpu.reciprocal %54 {approx = true} : vector<8x1xf32> -> vector<8x1xf32>
      %56 = vector.broadcast %55 : vector<8x1xf32> to vector<8x32xf32>
      %57 = arith.mulf %53, %56 : vector<8x32xf32>
      %c0_35 = arith.constant 0 : index
      %c0_36 = arith.constant 0 : index
      %58 = vector.load %arg7[%c0_35, %c0_36] : memref<8x32xf32, #tpu.memory_space<vmem>>, vector<8x32xf32>
      tpu.vector_store %arg7[%c0_35, %c0_36], %57 {strides = array<i32>} : memref<8x32xf32, #tpu.memory_space<vmem>>, vector<8x32xf32>,
    } else {
    }
    return
  }
  func.func @transform_0(%arg0: i32, %arg1: i32) -> (i32, i32, i32) {
    %c0_i32 = arith.constant 0 : i32
    %c0_i32_0 = arith.constant 0 : i32
    return %arg0, %arg1, %c0_i32 : i32, i32, i32
  }
  func.func @transform_1(%arg0: i32, %arg1: i32) -> (i32, i32) {
    %c0_i32 = arith.constant 0 : i32
    return %arg0, %arg1 : i32, i32
  }
  func.func @transform_2(%arg0: i32, %arg1: i32) -> (i32, i32) {
    %c0_i32 = arith.constant 0 : i32
    %c0_i32_0 = arith.constant 0 : i32
    %c0_i32_1 = arith.constant 0 : i32
    return %c0_i32, %c0_i32_0 : i32, i32
  }
  func.func @transform_3(%arg0: i32, %arg1: i32) -> (i32, i32) {
    %c0_i32 = arith.constant 0 : i32
    %c0_i32_0 = arith.constant 0 : i32
    %c0_i32_1 = arith.constant 0 : i32
    return %c0_i32, %c0_i32_0 : i32, i32
  }
  func.func @transform_4(%arg0: i32, %arg1: i32) -> (i32, i32) {
    %c0_i32 = arith.constant 0 : i32
    %c0_i32_0 = arith.constant 0 : i32
    %c0_i32_1 = arith.constant 0 : i32
    return %c0_i32, %c0_i32_0 : i32, i32
  }
  func.func @transform_5(%arg0: i32, %arg1: i32) -> (i32, i32) {
    %c0_i32 = arith.constant 0 : i32
    %c0_i32_0 = arith.constant 0 : i32
    return %arg0, %c0_i32 : i32, i32
  }
}

</mosaic_0001>

<llo_original>
// kernel: tpu_custom_call.1
$region0: #{tpu_custom_call.1}
  #allocation0 [shape = 'u32[]', space=smem, size = 0x4, offset = 0x4, fixed_abs, tag = 'smem constant byte address 0x4 - core index']
  #allocation1 [shape = 'u32[144,128]{1,0:T(1,128)}', space=vmem, size = 0x12000, scoped, tag = 'internal scratch']
  #allocation2 [shape = 'f32[8,1]{1,0:T(8,128)}', space=vmem, size = 0x1000, scoped, tag = 'scratch operand']
  #allocation3 [shape = 'f32[8,1]{1,0:T(8,128)}', space=vmem, size = 0x1000, scoped, tag = 'scratch operand']
  %s0 = inlined_call_operand.hbm [shape: f32[8,8,32], index: 0, kind: input, shape index: {}]
  %s1 = inlined_call_operand.hbm [shape: f32[8,8], index: 1, kind: input, shape index: {}]
  %s2 = inlined_call_operand.hbm [shape: bf16[32,32], index: 2, kind: input, shape index: {}]
  %s3 = inlined_call_operand.vmem [shape: f32[1,32], index: 3, kind: input, shape index: {}]
  %s4 = inlined_call_operand.vmem [shape: f32[1,32], index: 4, kind: input, shape index: {}]
  %s5 = inlined_call_operand.hbm [shape: f32[8,32], index: 5, kind: output, shape index: {}]
  %s6 = sld [smem:[#allocation0]]
  $region50: #{tpu_custom_call.1} parent=0
    _
  %s8 = ssub.s32 1, %s6
  %s9 = scalar_select 0, %s8, %s6
  $region1: #{tpu_custom_call.1} parent=0
    #allocation4 [shape = 'u8[32768]{0}', space=vmem, size = 0x8000, scoped, tag = 'input window, operand 0, single buffered']
    #allocation5 [shape = 's32[1]{0}', space=sflag, size = 0x4, scoped, tag = 'scoped memory for tpu_custom_call.1']
    #allocation6 [shape = 's32[1]{0}', space=sflag, size = 0x4, scoped, tag = 'scoped memory for tpu_custom_call.1']
    #allocation7 [shape = 'u8[4096]{0}', space=vmem, size = 0x1000, scoped, tag = 'input window, operand 1, single buffered']
    #allocation8 [shape = 's32[1]{0}', space=sflag, size = 0x4, scoped, tag = 'scoped memory for tpu_custom_call.1']
    #allocation9 [shape = 'u8[8192]{0}', space=vmem, size = 0x2000, scoped, tag = 'input window, operand 2, single buffered']
    #allocation10 [shape = 'u8[4096]{0}', space=vmem, size = 0x1000, scoped, tag = 'output window, operand 0, single buffered']
    %10 = vsyncpa [#allocation5], 0
    %11 = vsyncpa [#allocation8], 0
    %12 = vsyncpa [#allocation6], 0
    // Predicated region
    $region2: #{tpu_custom_call.1} parent=1 // pred_check
      _
    $region3: #{tpu_custom_call.1} parent=1 // pred_check_branch
      %14 = sbr.rel (0) target = $region5
    $region4: #{tpu_custom_call.1} parent=1 // pred_region
      %s16 = ssub.s32 1024, 1024
      %17 = vsyncadd [#allocation5], %s16
      %s18 = sshll.u32 [#allocation4], 4
      %s19 = int_to_ptr.vmem [resolvable:$true] %s18
      %24 = dma.hbm_to_vmem [thread:$0]  %s0, 1024, %s19, [#allocation5], 128, 128, 8
    $region5: #{tpu_custom_call.1} parent=1 // pred_fallthru
      _
    // Predicated region
    $region6: #{tpu_custom_call.1} parent=1 // pred_check
      _
    $region7: #{tpu_custom_call.1} parent=1 // pred_check_branch
      %26 = sbr.rel (0) target = $region9
    $region8: #{tpu_custom_call.1} parent=1 // pred_region
      %s28 = ssub.s32 128, 128
      %29 = vsyncadd [#allocation8], %s28
      %s31 = sshll.u32 [#allocation7], 4
      %s32 = int_to_ptr.vmem [resolvable:$true] %s31
      %34 = dma.hbm_to_vmem [thread:$0]  %s1, 128, %s32, [#allocation8]
    $region9: #{tpu_custom_call.1} parent=1 // pred_fallthru
      _
    // Predicated region
    $region10: #{tpu_custom_call.1} parent=1 // pred_check
      _
    $region11: #{tpu_custom_call.1} parent=1 // pred_check_branch
      %36 = sbr.rel (0) target = $region13
    $region12: #{tpu_custom_call.1} parent=1 // pred_region
      %s38 = ssub.s32 256, 256
      %39 = vsyncadd [#allocation8], %s38
      %s40 = sshll.u32 [#allocation9], 4
      %s41 = int_to_ptr.vmem [resolvable:$true] %s40
      %46 = dma.hbm_to_vmem [thread:$0]  %s2, 256, %s41, [#allocation8], 64, 64, 4
    $region13: #{tpu_custom_call.1} parent=1 // pred_fallthru
      _
    // Predicated region
    $region14: #{tpu_custom_call.1} parent=1 // pred_check
      _
    $region15: #{tpu_custom_call.1} parent=1 // pred_check_branch
      %48 = sbr.rel (0) target = $region17
    $region16: #{tpu_custom_call.1} parent=1 // pred_region
      _
    $region17: #{tpu_custom_call.1} parent=1 // pred_fallthru
      _
    // Predicated region
    $region18: #{tpu_custom_call.1} parent=1 // pred_check
      _
    $region19: #{tpu_custom_call.1} parent=1 // pred_check_branch
      %50 = sbr.rel (0) target = $region21
    $region20: #{tpu_custom_call.1} parent=1 // pred_region
      _
    $region21: #{tpu_custom_call.1} parent=1 // pred_fallthru
      _
    // Predicated region
    $region22: #{tpu_custom_call.1} parent=1 // pred_check
      _
    $region23: #{tpu_custom_call.1} parent=1 // pred_check_branch
      %52 = sbr.rel (0) target = $region25
    $region24: #{tpu_custom_call.1} parent=1 // pred_region
      %53 = dma.done [#allocation5], 1024
    $region25: #{tpu_custom_call.1} parent=1 // pred_fallthru
      _
    // Predicated region
    $region26: #{tpu_custom_call.1} parent=1 // pred_check
      _
    $region27: #{tpu_custom_call.1} parent=1 // pred_check_branch
      %55 = sbr.rel (0) target = $region29
    $region28: #{tpu_custom_call.1} parent=1 // pred_region
      %56 = dma.done [#allocation8], 128
    $region29: #{tpu_custom_call.1} parent=1 // pred_fallthru
      _
    // Predicated region
    $region30: #{tpu_custom_call.1} parent=1 // pred_check
      _
    $region31: #{tpu_custom_call.1} parent=1 // pred_check_branch
      %58 = sbr.rel (0) target = $region33
    $region32: #{tpu_custom_call.1} parent=1 // pred_region
      %59 = dma.done [#allocation8], 256
    $region33: #{tpu_custom_call.1} parent=1 // pred_fallthru
      _
    %p61 = scmp.eq.s32.totalorder 0, 0
    // Predicated region
    $region34: #{tpu_custom_call.1} parent=1 // pred_check
      %p62 = pneg %p61
    $region35: #{tpu_custom_call.1} parent=1 // pred_check_branch
      %64 = sbr.rel (%p62) target = $region37
    $region36: #{tpu_custom_call.1} parent=1 // pred_region
      %vm65 = vcmask 7168
      %66 = vst.msk [vmem:[#allocation2] sm:$0xff] %vm65, -inf
      %67 = vst.msk [vmem:[#allocation3] sm:$0xff] %vm65, 0.0
      %vm68 = vcmask 261120
      %69 = vst.msk [vmem:[#allocation10] sm:$0xff] %vm68, 0.0
    $region37: #{tpu_custom_call.1} parent=1 // pred_fallthru
      _
    %v70 = vld [vmem:[#allocation4] sm:$0xff]
    %v71 = vld [vmem:[#allocation4 + $0x8] sm:$0xff]
    %v72 = vld [vmem:[#allocation4 + $0x10] sm:$0xff]
    %v73 = vld [vmem:[#allocation4 + $0x18] sm:$0xff]
    %v74 = vld [vmem:[#allocation4 + $0x20] sm:$0xff]
    %v75 = vld [vmem:[#allocation4 + $0x28] sm:$0xff]
    %v76 = vld [vmem:[#allocation4 + $0x30] sm:$0xff]
    %v77 = vld [vmem:[#allocation4 + $0x38] sm:$0xff]
    %v78 = vpack.c.bf16 %v70, %v70
    %v79 = vpack.c.bf16 %v71, %v71
    %v80 = vpack.c.bf16 %v72, %v72
    %v81 = vpack.c.bf16 %v73, %v73
    %v82 = vpack.c.bf16 %v74, %v74
    %v83 = vpack.c.bf16 %v75, %v75
    %v84 = vpack.c.bf16 %v76, %v76
    %v85 = vpack.c.bf16 %v77, %v77
    %v86 = vld [vmem:[#allocation9] sm:$0xf]
    %v87 = vld [vmem:[#allocation9 + $0x4] sm:$0xf]
    %v88 = vld [vmem:[#allocation9 + $0x8] sm:$0xf]
    %v89 = vld [vmem:[#allocation9 + $0xc] sm:$0xf]
    %v90 = vld [vmem:[%s3] sm:$0x1]
    %v92 = vlaneseq
    %v93 = vshrl.u32 %v92, 7
    %v94 = vsub.s32 0, %v93
    %v95 = vrot.slane %v90, %v94
    %v105 = vunpack.c.l.b16 %v78
    %v106 = vunpack.c.l.b16 %v79
    %v107 = vunpack.c.l.b16 %v80
    %v108 = vunpack.c.l.b16 %v81
    %v109 = vunpack.c.l.b16 %v82
    %v110 = vunpack.c.l.b16 %v83
    %v111 = vunpack.c.l.b16 %v84
    %v112 = vunpack.c.l.b16 %v85
    %v113 = vpack.c.b16 %v106, %v105
    %v114 = vpack.c.b16 %v108, %v107
    %v115 = vpack.c.b16 %v110, %v109
    %v116 = vpack.c.b16 %v112, %v111
    %v121 = vunpack.c.l.b16 %v86
    %v122 = vunpack.c.l.b16 %v87
    %v123 = vunpack.c.l.b16 %v88
    %v124 = vunpack.c.l.b16 %v89
    %v125 = vpack.c.b16 %v122, %v121
    %v126 = vpack.c.b16 %v124, %v123
    %vm129 = vcmask 261120
    %v131 = vsel %vm129, %v113, 0
    %v134 = vsel %vm129, %v114, 0
    %v137 = vsel %vm129, %v115, 0
    %v140 = vsel %vm129, %v116, 0
    %142 = vmatprep.subr.bf16.mxu0 0
    %143 = vmatpush1.bf16.msra.mxu0 %v125
    %144 = vmatprep.subr.bf16.mxu0 0
    %145 = vmatpush1.bf16.msra.mxu0 %v126
    %146 = vmatprep.subr.bf16.mxu0 0
    %147 = vmatpush1.bf16.msra.mxu0 0
    %148 = vmatprep.subr.bf16.mxu0 0
    %149 = vmatpush1.bf16.msra.mxu0 0
    %150 = vmatprep.subr.bf16.mxu0 0
    %151 = vmatpush1.bf16.msra.mxu0 0
    %152 = vmatprep.subr.bf16.mxu0 0
    %153 = vmatpush1.bf16.msra.mxu0 0
    %154 = vmatprep.subr.bf16.mxu0 0
    %155 = vmatpush1.bf16.msra.mxu0 0
    %156 = vmatprep.subr.bf16.mxu0 0
    %157 = vmatpush1.bf16.msra.mxu0 0
    %158 = vmatprep.subr.bf16.mxu0 0
    %159 = vmatpush1.bf16.msra.mxu0 0
    %160 = vmatprep.subr.bf16.mxu0 0
    %161 = vmatpush1.bf16.msra.mxu0 0
    %162 = vmatprep.subr.bf16.mxu0 0
    %163 = vmatpush1.bf16.msra.mxu0 0
    %164 = vmatprep.subr.bf16.mxu0 0
    %165 = vmatpush1.bf16.msra.mxu0 0
    %166 = vmatprep.subr.bf16.mxu0 0
    %167 = vmatpush1.bf16.msra.mxu0 0
    %168 = vmatprep.subr.bf16.mxu0 0
    %169 = vmatpush1.bf16.msra.mxu0 0
    %170 = vmatprep.subr.bf16.mxu0 0
    %171 = vmatpush1.bf16.msra.mxu0 0
    %172 = vmatprep.subr.bf16.mxu0 0
    %173 = vmatpush1.bf16.msra.mxu0 0
    %174 = vmatprep.mubr.bf16.mxu0 0
    %175 = vmatmul.mubr.bf16.gmra.mrb[0].mxu0 %v131
    %v176 = vpop.f32.mrb[0].mxu0
    %v177 = vadd.f32 %v95, %v176
    %v178 = vpop.f32.mrb[0].mxu0
    %v179 = vpop.f32.mrb[0].mxu0
    %v180 = vadd.f32 %v95, %v179
    %v181 = vpop.f32.mrb[0].mxu0
    %182 = vmatprep.mubr.bf16.mxu0 0
    %183 = vmatmul.mubr.bf16.gmra.mrb[0].mxu0 %v134
    %v184 = vpop.f32.mrb[0].mxu0
    %v185 = vadd.f32 %v95, %v184
    %v186 = vpop.f32.mrb[0].mxu0
    %v187 = vpop.f32.mrb[0].mxu0
    %v188 = vadd.f32 %v95, %v187
    %v189 = vpop.f32.mrb[0].mxu0
    %190 = vmatprep.mubr.bf16.mxu0 0
    %191 = vmatmul.mubr.bf16.gmra.mrb[0].mxu0 %v137
    %v192 = vpop.f32.mrb[0].mxu0
    %v193 = vadd.f32 %v95, %v192
    %v194 = vpop.f32.mrb[0].mxu0
    %v195 = vpop.f32.mrb[0].mxu0
    %v196 = vadd.f32 %v95, %v195
    %v197 = vpop.f32.mrb[0].mxu0
    %198 = vmatprep.mubr.bf16.mxu0 0
    %199 = vmatmul.mubr.bf16.gmra.mrb[0].mxu0 %v140
    %v200 = vpop.f32.mrb[0].mxu0
    %v201 = vadd.f32 %v95, %v200
    %v202 = vpop.f32.mrb[0].mxu0
    %v203 = vpop.f32.mrb[0].mxu0
    %v204 = vadd.f32 %v95, %v203
    %v205 = vpop.f32.mrb[0].mxu0
    %206 = vdwg.mxu0
    %v207 = vtanh.pop %v177
    %v208 = vtanh.pop %v180
    %v209 = vtanh.pop %v185
    %v210 = vtanh.pop %v188
    %v211 = vtanh.pop %v193
    %v212 = vtanh.pop %v196
    %v213 = vtanh.pop %v201
    %v214 = vtanh.pop %v204
    %v215 = vld [vmem:[%s4] sm:$0x1]
    %v217 = vlaneseq
    %v218 = vshrl.u32 %v217, 7
    %v219 = vsub.s32 0, %v218
    %v220 = vrot.slane %v215, %v219
    %v222 = vmul.f32 %v207, %v220
    %v223 = vmul.f32 %v208, %v220
    %v224 = vmul.f32 %v209, %v220
    %v225 = vmul.f32 %v210, %v220
    %v226 = vmul.f32 %v211, %v220
    %v227 = vmul.f32 %v212, %v220
    %v228 = vmul.f32 %v213, %v220
    %v229 = vmul.f32 %v214, %v220
    %v230 = vsel %vm129, %v222, 0.0
    %231 = vadd.xlane.f32.xlu0 %v230
    %v232 = vpop.xlane.xlu0 %231
    %v233 = vsel %vm129, %v223, 0.0
    %234 = vadd.xlane.f32.xlu0 %v233
    %v235 = vpop.xlane.xlu0 %234
    %v236 = vsel %vm129, %v224, 0.0
    %237 = vadd.xlane.f32.xlu0 %v236
    %v238 = vpop.xlane.xlu0 %237
    %v239 = vsel %vm129, %v225, 0.0
    %240 = vadd.xlane.f32.xlu0 %v239
    %v241 = vpop.xlane.xlu0 %240
    %v242 = vsel %vm129, %v226, 0.0
    %243 = vadd.xlane.f32.xlu0 %v242
    %v244 = vpop.xlane.xlu0 %243
    %v245 = vsel %vm129, %v227, 0.0
    %246 = vadd.xlane.f32.xlu0 %v245
    %v247 = vpop.xlane.xlu0 %246
    %v248 = vsel %vm129, %v228, 0.0
    %249 = vadd.xlane.f32.xlu0 %v248
    %v250 = vpop.xlane.xlu0 %249
    %v251 = vsel %vm129, %v229, 0.0
    %252 = vadd.xlane.f32.xlu0 %v251
    %v253 = vpop.xlane.xlu0 %252
    %v254 = vld [vmem:[#allocation7] sm:$0xff]
    %v256 = vlaneseq
    %v257 = vshrl.u32 %v256, 7
    %v258 = vsub.s32 0, %v257
    %v259 = vrot.slane %v254, %v258
    %261 = vbcast.lane.b32.xlu0 %v259, 256
    %v262 = vpop.permute.xlu0 %261
    %v263 = vlaneseq
    %v264 = vshrl.u32 %v263, 7
    %v265 = vsub.s32 1, %v264
    %v266 = vrot.slane %v254, %v265
    %268 = vbcast.lane.b32.xlu0 %v266, 256
    %v269 = vpop.permute.xlu0 %268
    %v270 = vlaneseq
    %v271 = vshrl.u32 %v270, 7
    %v272 = vsub.s32 2, %v271
    %v273 = vrot.slane %v254, %v272
    %275 = vbcast.lane.b32.xlu0 %v273, 256
    %v276 = vpop.permute.xlu0 %275
    %v277 = vlaneseq
    %v278 = vshrl.u32 %v277, 7
    %v279 = vsub.s32 3, %v278
    %v280 = vrot.slane %v254, %v279
    %282 = vbcast.lane.b32.xlu0 %v280, 256
    %v283 = vpop.permute.xlu0 %282
    %v284 = vlaneseq
    %v285 = vshrl.u32 %v284, 7
    %v286 = vsub.s32 4, %v285
    %v287 = vrot.slane %v254, %v286
    %289 = vbcast.lane.b32.xlu0 %v287, 256
    %v290 = vpop.permute.xlu0 %289
    %v291 = vlaneseq
    %v292 = vshrl.u32 %v291, 7
    %v293 = vsub.s32 5, %v292
    %v294 = vrot.slane %v254, %v293
    %296 = vbcast.lane.b32.xlu0 %v294, 256
    %v297 = vpop.permute.xlu0 %296
    %v298 = vlaneseq
    %v299 = vshrl.u32 %v298, 7
    %v300 = vsub.s32 6, %v299
    %v301 = vrot.slane %v254, %v300
    %303 = vbcast.lane.b32.xlu0 %v301, 256
    %v304 = vpop.permute.xlu0 %303
    %v305 = vlaneseq
    %v306 = vshrl.u32 %v305, 7
    %v307 = vsub.s32 7, %v306
    %v308 = vrot.slane %v254, %v307
    %310 = vbcast.lane.b32.xlu0 %v308, 256
    %v311 = vpop.permute.xlu0 %310
    %v320 = vmul.f32 %v232, %v262
    %v321 = vmul.f32 %v235, %v269
    %v322 = vmul.f32 %v238, %v276
    %v323 = vmul.f32 %v241, %v283
    %v324 = vmul.f32 %v244, %v290
    %v325 = vmul.f32 %v247, %v297
    %v326 = vmul.f32 %v250, %v304
    %v327 = vmul.f32 %v253, %v311
    %v328 = vsub.f32 1.0, %v254
    %v329 = vmul.f32 %v328, -10000.0
    %v331 = vlaneseq
    %v332 = vshrl.u32 %v331, 7
    %v333 = vsub.s32 0, %v332
    %v334 = vrot.slane %v329, %v333
    %336 = vbcast.lane.b32.xlu0 %v334, 256
    %v337 = vpop.permute.xlu0 %336
    %v338 = vlaneseq
    %v339 = vshrl.u32 %v338, 7
    %v340 = vsub.s32 1, %v339
    %v341 = vrot.slane %v329, %v340
    %343 = vbcast.lane.b32.xlu0 %v341, 256
    %v344 = vpop.permute.xlu0 %343
    %v345 = vlaneseq
    %v346 = vshrl.u32 %v345, 7
    %v347 = vsub.s32 2, %v346
    %v348 = vrot.slane %v329, %v347
    %350 = vbcast.lane.b32.xlu0 %v348, 256
    %v351 = vpop.permute.xlu0 %350
    %v352 = vlaneseq
    %v353 = vshrl.u32 %v352, 7
    %v354 = vsub.s32 3, %v353
    %v355 = vrot.slane %v329, %v354
    %357 = vbcast.lane.b32.xlu0 %v355, 256
    %v358 = vpop.permute.xlu0 %357
    %v359 = vlaneseq
    %v360 = vshrl.u32 %v359, 7
    %v361 = vsub.s32 4, %v360
    %v362 = vrot.slane %v329, %v361
    %364 = vbcast.lane.b32.xlu0 %v362, 256
    %v365 = vpop.permute.xlu0 %364
    %v366 = vlaneseq
    %v367 = vshrl.u32 %v366, 7
    %v368 = vsub.s32 5, %v367
    %v369 = vrot.slane %v329, %v368
    %371 = vbcast.lane.b32.xlu0 %v369, 256
    %v372 = vpop.permute.xlu0 %371
    %v373 = vlaneseq
    %v374 = vshrl.u32 %v373, 7
    %v375 = vsub.s32 6, %v374
    %v376 = vrot.slane %v329, %v375
    %378 = vbcast.lane.b32.xlu0 %v376, 256
    %v379 = vpop.permute.xlu0 %378
    %v380 = vlaneseq
    %v381 = vshrl.u32 %v380, 7
    %v382 = vsub.s32 7, %v381
    %v383 = vrot.slane %v329, %v382
    %385 = vbcast.lane.b32.xlu0 %v383, 256
    %v386 = vpop.permute.xlu0 %385
    %v395 = vadd.f32 %v320, %v337
    %v396 = vadd.f32 %v321, %v344
    %v397 = vadd.f32 %v322, %v351
    %v398 = vadd.f32 %v323, %v358
    %v399 = vadd.f32 %v324, %v365
    %v400 = vadd.f32 %v325, %v372
    %v401 = vadd.f32 %v326, %v379
    %v402 = vadd.f32 %v327, %v386
    %v403 = vld [vmem:[#allocation2] sm:$0xff]
    %412 = vset.pattern.permute.xlu0 0
    %413 = vperm.xlu0 %412, %v395
    %v414 = vpop.permute.xlu0 %413
    %415 = vset.pattern.permute.xlu0 0
    %416 = vperm.xlu0 %415, %v396
    %v417 = vpop.permute.xlu0 %416
    %418 = vset.pattern.permute.xlu0 0
    %419 = vperm.xlu0 %418, %v397
    %v420 = vpop.permute.xlu0 %419
    %421 = vset.pattern.permute.xlu0 0
    %422 = vperm.xlu0 %421, %v398
    %v423 = vpop.permute.xlu0 %422
    %424 = vset.pattern.permute.xlu0 0
    %425 = vperm.xlu0 %424, %v399
    %v426 = vpop.permute.xlu0 %425
    %427 = vset.pattern.permute.xlu0 0
    %428 = vperm.xlu0 %427, %v400
    %v429 = vpop.permute.xlu0 %428
    %430 = vset.pattern.permute.xlu0 0
    %431 = vperm.xlu0 %430, %v401
    %v432 = vpop.permute.xlu0 %431
    %433 = vset.pattern.permute.xlu0 0
    %434 = vperm.xlu0 %433, %v402
    %v435 = vpop.permute.xlu0 %434
    %v436 = vlaneseq
    %v437 = vand.u32 %v436, 127
    %v438 = vlaneseq
    %v439 = vshrl.u32 %v438, 7
    %v440 = vsub.s32 %v437, %v439
    %v441 = vrot.slane %v414, %v440
    %v442 = vlaneseq
    %v443 = vshrl.u32 %v442, 7
    %v444 = vsub.s32 %v437, %v443
    %v445 = vrot.slane %v417, %v444
    %v446 = vlaneseq
    %v447 = vshrl.u32 %v446, 7
    %v448 = vsub.s32 %v437, %v447
    %v449 = vrot.slane %v420, %v448
    %v450 = vlaneseq
    %v451 = vshrl.u32 %v450, 7
    %v452 = vsub.s32 %v437, %v451
    %v453 = vrot.slane %v423, %v452
    %v454 = vlaneseq
    %v455 = vshrl.u32 %v454, 7
    %v456 = vsub.s32 %v437, %v455
    %v457 = vrot.slane %v426, %v456
    %v458 = vlaneseq
    %v459 = vshrl.u32 %v458, 7
    %v460 = vsub.s32 %v437, %v459
    %v461 = vrot.slane %v429, %v460
    %v462 = vlaneseq
    %v463 = vshrl.u32 %v462, 7
    %v464 = vsub.s32 %v437, %v463
    %v465 = vrot.slane %v432, %v464
    %v466 = vlaneseq
    %v467 = vshrl.u32 %v466, 7
    %v468 = vsub.s32 %v437, %v467
    %v469 = vrot.slane %v435, %v468
    %vm470 = vcmask 1041409
    %v471 = vsel %vm470, %v445, %v441
    %vm472 = vcmask 1042434
    %v473 = vsel %vm472, %v449, %v471
    %vm474 = vcmask 1043459
    %v475 = vsel %vm474, %v453, %v473
    %vm476 = vcmask 1044484
    %v477 = vsel %vm476, %v457, %v475
    %vm478 = vcmask 1045509
    %v479 = vsel %vm478, %v461, %v477
    %vm480 = vcmask 1046534
    %v481 = vsel %vm480, %v465, %v479
    %vm482 = vcmask 1047559
    %v483 = vsel %vm482, %v469, %v481
    %vm485 = vcmask 64512
    %v486 = vsel %vm485, %v483, -inf
    %487 = vmax.xlane.f32.xlu0 %v486
    %v488 = vpop.xlane.xlu0 %487
    %v489 = vmax.f32 %v403, %v488
    %v490 = vsub.f32 %v403, %v489
    %v491 = vmul.f32 %v490, 1.442695
    %v492 = vpow.pop %v491
    %494 = vset.pattern.permute.xlu0 0
    %495 = vperm.xlu0 %494, %v489
    %v496 = vpop.permute.xlu0 %495
    %v497 = vlaneseq
    %v498 = vshrl.u32 %v497, 7
    %v499 = vsub.s32 0, %v498
    %v500 = vrot.slane %v496, %v499
    %v501 = vlaneseq
    %v502 = vshrl.u32 %v501, 7
    %v503 = vsub.s32 1, %v502
    %v504 = vrot.slane %v496, %v503
    %v505 = vlaneseq
    %v506 = vshrl.u32 %v505, 7
    %v507 = vsub.s32 2, %v506
    %v508 = vrot.slane %v496, %v507
    %v509 = vlaneseq
    %v510 = vshrl.u32 %v509, 7
    %v511 = vsub.s32 3, %v510
    %v512 = vrot.slane %v496, %v511
    %v513 = vlaneseq
    %v514 = vshrl.u32 %v513, 7
    %v515 = vsub.s32 4, %v514
    %v516 = vrot.slane %v496, %v515
    %v517 = vlaneseq
    %v518 = vshrl.u32 %v517, 7
    %v519 = vsub.s32 5, %v518
    %v520 = vrot.slane %v496, %v519
    %v521 = vlaneseq
    %v522 = vshrl.u32 %v521, 7
    %v523 = vsub.s32 6, %v522
    %v524 = vrot.slane %v496, %v523
    %v525 = vlaneseq
    %v526 = vshrl.u32 %v525, 7
    %v527 = vsub.s32 7, %v526
    %v528 = vrot.slane %v496, %v527
    %v537 = vsub.f32 %v395, %v500
    %v538 = vsub.f32 %v396, %v504
    %v539 = vsub.f32 %v397, %v508
    %v540 = vsub.f32 %v398, %v512
    %v541 = vsub.f32 %v399, %v516
    %v542 = vsub.f32 %v400, %v520
    %v543 = vsub.f32 %v401, %v524
    %v544 = vsub.f32 %v402, %v528
    %v545 = vmul.f32 %v537, 1.442695
    %v546 = vpow.pop %v545
    %v547 = vmul.f32 %v538, 1.442695
    %v548 = vpow.pop %v547
    %v549 = vmul.f32 %v539, 1.442695
    %v550 = vpow.pop %v549
    %v551 = vmul.f32 %v540, 1.442695
    %v552 = vpow.pop %v551
    %v553 = vmul.f32 %v541, 1.442695
    %v554 = vpow.pop %v553
    %v555 = vmul.f32 %v542, 1.442695
    %v556 = vpow.pop %v555
    %v557 = vmul.f32 %v543, 1.442695
    %v558 = vpow.pop %v557
    %v559 = vmul.f32 %v544, 1.442695
    %v560 = vpow.pop %v559
    %v561 = vld [vmem:[#allocation3] sm:$0xff]
    %v562 = vmul.f32 %v492, %v561
    %571 = vset.pattern.permute.xlu0 0
    %572 = vperm.xlu0 %571, %v546
    %v573 = vpop.permute.xlu0 %572
    %574 = vset.pattern.permute.xlu0 0
    %575 = vperm.xlu0 %574, %v548
    %v576 = vpop.permute.xlu0 %575
    %577 = vset.pattern.permute.xlu0 0
    %578 = vperm.xlu0 %577, %v550
    %v579 = vpop.permute.xlu0 %578
    %580 = vset.pattern.permute.xlu0 0
    %581 = vperm.xlu0 %580, %v552
    %v582 = vpop.permute.xlu0 %581
    %583 = vset.pattern.permute.xlu0 0
    %584 = vperm.xlu0 %583, %v554
    %v585 = vpop.permute.xlu0 %584
    %586 = vset.pattern.permute.xlu0 0
    %587 = vperm.xlu0 %586, %v556
    %v588 = vpop.permute.xlu0 %587
    %589 = vset.pattern.permute.xlu0 0
    %590 = vperm.xlu0 %589, %v558
    %v591 = vpop.permute.xlu0 %590
    %592 = vset.pattern.permute.xlu0 0
    %593 = vperm.xlu0 %592, %v560
    %v594 = vpop.permute.xlu0 %593
    %v595 = vlaneseq
    %v596 = vshrl.u32 %v595, 7
    %v597 = vsub.s32 %v437, %v596
    %v598 = vrot.slane %v573, %v597
    %v599 = vlaneseq
    %v600 = vshrl.u32 %v599, 7
    %v601 = vsub.s32 %v437, %v600
    %v602 = vrot.slane %v576, %v601
    %v603 = vlaneseq
    %v604 = vshrl.u32 %v603, 7
    %v605 = vsub.s32 %v437, %v604
    %v606 = vrot.slane %v579, %v605
    %v607 = vlaneseq
    %v608 = vshrl.u32 %v607, 7
    %v609 = vsub.s32 %v437, %v608
    %v610 = vrot.slane %v582, %v609
    %v611 = vlaneseq
    %v612 = vshrl.u32 %v611, 7
    %v613 = vsub.s32 %v437, %v612
    %v614 = vrot.slane %v585, %v613
    %v615 = vlaneseq
    %v616 = vshrl.u32 %v615, 7
    %v617 = vsub.s32 %v437, %v616
    %v618 = vrot.slane %v588, %v617
    %v619 = vlaneseq
    %v620 = vshrl.u32 %v619, 7
    %v621 = vsub.s32 %v437, %v620
    %v622 = vrot.slane %v591, %v621
    %v623 = vlaneseq
    %v624 = vshrl.u32 %v623, 7
    %v625 = vsub.s32 %v437, %v624
    %v626 = vrot.slane %v594, %v625
    %v627 = vsel %vm470, %v602, %v598
    %v628 = vsel %vm472, %v606, %v627
    %v629 = vsel %vm474, %v610, %v628
    %v630 = vsel %vm476, %v614, %v629
    %v631 = vsel %vm478, %v618, %v630
    %v632 = vsel %vm480, %v622, %v631
    %v633 = vsel %vm482, %v626, %v632
    %v635 = vsel %vm485, %v633, 0.0
    %636 = vadd.xlane.f32.xlu0 %v635
    %v637 = vpop.xlane.xlu0 %636
    %v638 = vadd.f32 %v562, %v637
    %vm639 = vcmask 7168
    %640 = vst.msk [vmem:[#allocation3] sm:$0xff] %vm639, %v638
    %641 = vst.msk [vmem:[#allocation2] sm:$0xff] %vm639, %v489
    %v642 = vpack.c.bf16 %v546, %v546
    %v643 = vpack.c.bf16 %v548, %v548
    %v644 = vpack.c.bf16 %v550, %v550
    %v645 = vpack.c.bf16 %v552, %v552
    %v646 = vpack.c.bf16 %v554, %v554
    %v647 = vpack.c.bf16 %v556, %v556
    %v648 = vpack.c.bf16 %v558, %v558
    %v649 = vpack.c.bf16 %v560, %v560
    %v651 = vunpack.c.l.b16 %v642
    %652 = vset.pattern.permute.xlu0 0
    %653 = vperm.xlu0 %652, %v651
    %v654 = vpop.permute.xlu0 %653
    %v655 = vlaneseq
    %v656 = vshrl.u32 %v655, 7
    %v657 = vsub.s32 %v437, %v656
    %v658 = vrot.slane %v654, %v657
    %v659 = vpack.c.b16 %v658, %v658
    %v661 = vsel %vm485, %v659, 0
    %vm663 = vcmask 1043456
    %v665 = vsel %vm663, %v78, 0
    %667 = vmatprep.subr.bf16.mxu0 0
    %668 = vmatpush1.bf16.msra.mxu0 %v665
    %669 = vmatprep.subr.bf16.mxu0 0
    %670 = vmatpush1.bf16.msra.mxu0 0
    %671 = vmatprep.subr.bf16.mxu0 0
    %672 = vmatpush1.bf16.msra.mxu0 0
    %673 = vmatprep.subr.bf16.mxu0 0
    %674 = vmatpush1.bf16.msra.mxu0 0
    %675 = vmatprep.subr.bf16.mxu0 0
    %676 = vmatpush1.bf16.msra.mxu0 0
    %677 = vmatprep.subr.bf16.mxu0 0
    %678 = vmatpush1.bf16.msra.mxu0 0
    %679 = vmatprep.subr.bf16.mxu0 0
    %680 = vmatpush1.bf16.msra.mxu0 0
    %681 = vmatprep.subr.bf16.mxu0 0
    %682 = vmatpush1.bf16.msra.mxu0 0
    %683 = vmatprep.subr.bf16.mxu0 0
    %684 = vmatpush1.bf16.msra.mxu0 0
    %685 = vmatprep.subr.bf16.mxu0 0
    %686 = vmatpush1.bf16.msra.mxu0 0
    %687 = vmatprep.subr.bf16.mxu0 0
    %688 = vmatpush1.bf16.msra.mxu0 0
    %689 = vmatprep.subr.bf16.mxu0 0
    %690 = vmatpush1.bf16.msra.mxu0 0
    %691 = vmatprep.subr.bf16.mxu0 0
    %692 = vmatpush1.bf16.msra.mxu0 0
    %693 = vmatprep.subr.bf16.mxu0 0
    %694 = vmatpush1.bf16.msra.mxu0 0
    %695 = vmatprep.subr.bf16.mxu0 0
    %696 = vmatpush1.bf16.msra.mxu0 0
    %697 = vmatprep.subr.bf16.mxu0 0
    %698 = vmatpush1.bf16.msra.mxu0 0
    %699 = vmatprep.mubr.bf16.mxu0 0
    %700 = vmatmul.mubr.bf16.gmra.mrb[0].mxu0 %v661
    %v701 = vpop.f32.mrb[0].mxu0
    %v702 = vadd.f32 0.0, %v701
    %v703 = vpop.f32.mrb[0].mxu0
    %v704 = vpop.f32.mrb[0].mxu0
    %v705 = vpop.f32.mrb[0].mxu0
    %706 = vdwg.mxu0
    %v708 = vunpack.c.l.b16 %v643
    %709 = vset.pattern.permute.xlu0 0
    %710 = vperm.xlu0 %709, %v708
    %v711 = vpop.permute.xlu0 %710
    %v712 = vlaneseq
    %v713 = vshrl.u32 %v712, 7
    %v714 = vsub.s32 %v437, %v713
    %v715 = vrot.slane %v711, %v714
    %v716 = vpack.c.b16 %v715, %v715
    %v718 = vsel %vm485, %v716, 0
    %v721 = vsel %vm663, %v79, 0
    %723 = vmatprep.subr.bf16.mxu0 0
    %724 = vmatpush1.bf16.msra.mxu0 %v721
    %725 = vmatprep.subr.bf16.mxu0 0
    %726 = vmatpush1.bf16.msra.mxu0 0
    %727 = vmatprep.subr.bf16.mxu0 0
    %728 = vmatpush1.bf16.msra.mxu0 0
    %729 = vmatprep.subr.bf16.mxu0 0
    %730 = vmatpush1.bf16.msra.mxu0 0
    %731 = vmatprep.subr.bf16.mxu0 0
    %732 = vmatpush1.bf16.msra.mxu0 0
    %733 = vmatprep.subr.bf16.mxu0 0
    %734 = vmatpush1.bf16.msra.mxu0 0
    %735 = vmatprep.subr.bf16.mxu0 0
    %736 = vmatpush1.bf16.msra.mxu0 0
    %737 = vmatprep.subr.bf16.mxu0 0
    %738 = vmatpush1.bf16.msra.mxu0 0
    %739 = vmatprep.subr.bf16.mxu0 0
    %740 = vmatpush1.bf16.msra.mxu0 0
    %741 = vmatprep.subr.bf16.mxu0 0
    %742 = vmatpush1.bf16.msra.mxu0 0
    %743 = vmatprep.subr.bf16.mxu0 0
    %744 = vmatpush1.bf16.msra.mxu0 0
    %745 = vmatprep.subr.bf16.mxu0 0
    %746 = vmatpush1.bf16.msra.mxu0 0
    %747 = vmatprep.subr.bf16.mxu0 0
    %748 = vmatpush1.bf16.msra.mxu0 0
    %749 = vmatprep.subr.bf16.mxu0 0
    %750 = vmatpush1.bf16.msra.mxu0 0
    %751 = vmatprep.subr.bf16.mxu0 0
    %752 = vmatpush1.bf16.msra.mxu0 0
    %753 = vmatprep.subr.bf16.mxu0 0
    %754 = vmatpush1.bf16.msra.mxu0 0
    %755 = vmatprep.mubr.bf16.mxu0 0
    %756 = vmatmul.mubr.bf16.gmra.mrb[0].mxu0 %v718
    %v757 = vpop.f32.mrb[0].mxu0
    %v758 = vadd.f32 0.0, %v757
    %v759 = vpop.f32.mrb[0].mxu0
    %v760 = vpop.f32.mrb[0].mxu0
    %v761 = vpop.f32.mrb[0].mxu0
    %762 = vdwg.mxu0
    %v764 = vunpack.c.l.b16 %v644
    %765 = vset.pattern.permute.xlu0 0
    %766 = vperm.xlu0 %765, %v764
    %v767 = vpop.permute.xlu0 %766
    %v768 = vlaneseq
    %v769 = vshrl.u32 %v768, 7
    %v770 = vsub.s32 %v437, %v769
    %v771 = vrot.slane %v767, %v770
    %v772 = vpack.c.b16 %v771, %v771
    %v774 = vsel %vm485, %v772, 0
    %v777 = vsel %vm663, %v80, 0
    %779 = vmatprep.subr.bf16.mxu0 0
    %780 = vmatpush1.bf16.msra.mxu0 %v777
    %781 = vmatprep.subr.bf16.mxu0 0
    %782 = vmatpush1.bf16.msra.mxu0 0
    %783 = vmatprep.subr.bf16.mxu0 0
    %784 = vmatpush1.bf16.msra.mxu0 0
    %785 = vmatprep.subr.bf16.mxu0 0
    %786 = vmatpush1.bf16.msra.mxu0 0
    %787 = vmatprep.subr.bf16.mxu0 0
    %788 = vmatpush1.bf16.msra.mxu0 0
    %789 = vmatprep.subr.bf16.mxu0 0
    %790 = vmatpush1.bf16.msra.mxu0 0
    %791 = vmatprep.subr.bf16.mxu0 0
    %792 = vmatpush1.bf16.msra.mxu0 0
    %793 = vmatprep.subr.bf16.mxu0 0
    %794 = vmatpush1.bf16.msra.mxu0 0
    %795 = vmatprep.subr.bf16.mxu0 0
    %796 = vmatpush1.bf16.msra.mxu0 0
    %797 = vmatprep.subr.bf16.mxu0 0
    %798 = vmatpush1.bf16.msra.mxu0 0
    %799 = vmatprep.subr.bf16.mxu0 0
    %800 = vmatpush1.bf16.msra.mxu0 0
    %801 = vmatprep.subr.bf16.mxu0 0
    %802 = vmatpush1.bf16.msra.mxu0 0
    %803 = vmatprep.subr.bf16.mxu0 0
    %804 = vmatpush1.bf16.msra.mxu0 0
    %805 = vmatprep.subr.bf16.mxu0 0
    %806 = vmatpush1.bf16.msra.mxu0 0
    %807 = vmatprep.subr.bf16.mxu0 0
    %808 = vmatpush1.bf16.msra.mxu0 0
    %809 = vmatprep.subr.bf16.mxu0 0
    %810 = vmatpush1.bf16.msra.mxu0 0
    %811 = vmatprep.mubr.bf16.mxu0 0
    %812 = vmatmul.mubr.bf16.gmra.mrb[0].mxu0 %v774
    %v813 = vpop.f32.mrb[0].mxu0
    %v814 = vadd.f32 0.0, %v813
    %v815 = vpop.f32.mrb[0].mxu0
    %v816 = vpop.f32.mrb[0].mxu0
    %v817 = vpop.f32.mrb[0].mxu0
    %818 = vdwg.mxu0
    %v820 = vunpack.c.l.b16 %v645
    %821 = vset.pattern.permute.xlu0 0
    %822 = vperm.xlu0 %821, %v820
    %v823 = vpop.permute.xlu0 %822
    %v824 = vlaneseq
    %v825 = vshrl.u32 %v824, 7
    %v826 = vsub.s32 %v437, %v825
    %v827 = vrot.slane %v823, %v826
    %v828 = vpack.c.b16 %v827, %v827
    %v830 = vsel %vm485, %v828, 0
    %v833 = vsel %vm663, %v81, 0
    %835 = vmatprep.subr.bf16.mxu0 0
    %836 = vmatpush1.bf16.msra.mxu0 %v833
    %837 = vmatprep.subr.bf16.mxu0 0
    %838 = vmatpush1.bf16.msra.mxu0 0
    %839 = vmatprep.subr.bf16.mxu0 0
    %840 = vmatpush1.bf16.msra.mxu0 0
    %841 = vmatprep.subr.bf16.mxu0 0
    %842 = vmatpush1.bf16.msra.mxu0 0
    %843 = vmatprep.subr.bf16.mxu0 0
    %844 = vmatpush1.bf16.msra.mxu0 0
    %845 = vmatprep.subr.bf16.mxu0 0
    %846 = vmatpush1.bf16.msra.mxu0 0
    %847 = vmatprep.subr.bf16.mxu0 0
    %848 = vmatpush1.bf16.msra.mxu0 0
    %849 = vmatprep.subr.bf16.mxu0 0
    %850 = vmatpush1.bf16.msra.mxu0 0
    %851 = vmatprep.subr.bf16.mxu0 0
    %852 = vmatpush1.bf16.msra.mxu0 0
    %853 = vmatprep.subr.bf16.mxu0 0
    %854 = vmatpush1.bf16.msra.mxu0 0
    %855 = vmatprep.subr.bf16.mxu0 0
    %856 = vmatpush1.bf16.msra.mxu0 0
    %857 = vmatprep.subr.bf16.mxu0 0
    %858 = vmatpush1.bf16.msra.mxu0 0
    %859 = vmatprep.subr.bf16.mxu0 0
    %860 = vmatpush1.bf16.msra.mxu0 0
    %861 = vmatprep.subr.bf16.mxu0 0
    %862 = vmatpush1.bf16.msra.mxu0 0
    %863 = vmatprep.subr.bf16.mxu0 0
    %864 = vmatpush1.bf16.msra.mxu0 0
    %865 = vmatprep.subr.bf16.mxu0 0
    %866 = vmatpush1.bf16.msra.mxu0 0
    %867 = vmatprep.mubr.bf16.mxu0 0
    %868 = vmatmul.mubr.bf16.gmra.mrb[0].mxu0 %v830
    %v869 = vpop.f32.mrb[0].mxu0
    %v870 = vadd.f32 0.0, %v869
    %v871 = vpop.f32.mrb[0].mxu0
    %v872 = vpop.f32.mrb[0].mxu0
    %v873 = vpop.f32.mrb[0].mxu0
    %874 = vdwg.mxu0
    %v876 = vunpack.c.l.b16 %v646
    %877 = vset.pattern.permute.xlu0 0
    %878 = vperm.xlu0 %877, %v876
    %v879 = vpop.permute.xlu0 %878
    %v880 = vlaneseq
    %v881 = vshrl.u32 %v880, 7
    %v882 = vsub.s32 %v437, %v881
    %v883 = vrot.slane %v879, %v882
    %v884 = vpack.c.b16 %v883, %v883
    %v886 = vsel %vm485, %v884, 0
    %v889 = vsel %vm663, %v82, 0
    %891 = vmatprep.subr.bf16.mxu0 0
    %892 = vmatpush1.bf16.msra.mxu0 %v889
    %893 = vmatprep.subr.bf16.mxu0 0
    %894 = vmatpush1.bf16.msra.mxu0 0
    %895 = vmatprep.subr.bf16.mxu0 0
    %896 = vmatpush1.bf16.msra.mxu0 0
    %897 = vmatprep.subr.bf16.mxu0 0
    %898 = vmatpush1.bf16.msra.mxu0 0
    %899 = vmatprep.subr.bf16.mxu0 0
    %900 = vmatpush1.bf16.msra.mxu0 0
    %901 = vmatprep.subr.bf16.mxu0 0
    %902 = vmatpush1.bf16.msra.mxu0 0
    %903 = vmatprep.subr.bf16.mxu0 0
    %904 = vmatpush1.bf16.msra.mxu0 0
    %905 = vmatprep.subr.bf16.mxu0 0
    %906 = vmatpush1.bf16.msra.mxu0 0
    %907 = vmatprep.subr.bf16.mxu0 0
    %908 = vmatpush1.bf16.msra.mxu0 0
    %909 = vmatprep.subr.bf16.mxu0 0
    %910 = vmatpush1.bf16.msra.mxu0 0
    %911 = vmatprep.subr.bf16.mxu0 0
    %912 = vmatpush1.bf16.msra.mxu0 0
    %913 = vmatprep.subr.bf16.mxu0 0
    %914 = vmatpush1.bf16.msra.mxu0 0
    %915 = vmatprep.subr.bf16.mxu0 0
    %916 = vmatpush1.bf16.msra.mxu0 0
    %917 = vmatprep.subr.bf16.mxu0 0
    %918 = vmatpush1.bf16.msra.mxu0 0
    %919 = vmatprep.subr.bf16.mxu0 0
    %920 = vmatpush1.bf16.msra.mxu0 0
    %921 = vmatprep.subr.bf16.mxu0 0
    %922 = vmatpush1.bf16.msra.mxu0 0
    %923 = vmatprep.mubr.bf16.mxu0 0
    %924 = vmatmul.mubr.bf16.gmra.mrb[0].mxu0 %v886
    %v925 = vpop.f32.mrb[0].mxu0
    %v926 = vadd.f32 0.0, %v925
    %v927 = vpop.f32.mrb[0].mxu0
    %v928 = vpop.f32.mrb[0].mxu0
    %v929 = vpop.f32.mrb[0].mxu0
    %930 = vdwg.mxu0
    %v932 = vunpack.c.l.b16 %v647
    %933 = vset.pattern.permute.xlu0 0
    %934 = vperm.xlu0 %933, %v932
    %v935 = vpop.permute.xlu0 %934
    %v936 = vlaneseq
    %v937 = vshrl.u32 %v936, 7
    %v938 = vsub.s32 %v437, %v937
    %v939 = vrot.slane %v935, %v938
    %v940 = vpack.c.b16 %v939, %v939
    %v942 = vsel %vm485, %v940, 0
    %v945 = vsel %vm663, %v83, 0
    %947 = vmatprep.subr.bf16.mxu0 0
    %948 = vmatpush1.bf16.msra.mxu0 %v945
    %949 = vmatprep.subr.bf16.mxu0 0
    %950 = vmatpush1.bf16.msra.mxu0 0
    %951 = vmatprep.subr.bf16.mxu0 0
    %952 = vmatpush1.bf16.msra.mxu0 0
    %953 = vmatprep.subr.bf16.mxu0 0
    %954 = vmatpush1.bf16.msra.mxu0 0
    %955 = vmatprep.subr.bf16.mxu0 0
    %956 = vmatpush1.bf16.msra.mxu0 0
    %957 = vmatprep.subr.bf16.mxu0 0
    %958 = vmatpush1.bf16.msra.mxu0 0
    %959 = vmatprep.subr.bf16.mxu0 0
    %960 = vmatpush1.bf16.msra.mxu0 0
    %961 = vmatprep.subr.bf16.mxu0 0
    %962 = vmatpush1.bf16.msra.mxu0 0
    %963 = vmatprep.subr.bf16.mxu0 0
    %964 = vmatpush1.bf16.msra.mxu0 0
    %965 = vmatprep.subr.bf16.mxu0 0
    %966 = vmatpush1.bf16.msra.mxu0 0
    %967 = vmatprep.subr.bf16.mxu0 0
    %968 = vmatpush1.bf16.msra.mxu0 0
    %969 = vmatprep.subr.bf16.mxu0 0
    %970 = vmatpush1.bf16.msra.mxu0 0
    %971 = vmatprep.subr.bf16.mxu0 0
    %972 = vmatpush1.bf16.msra.mxu0 0
    %973 = vmatprep.subr.bf16.mxu0 0
    %974 = vmatpush1.bf16.msra.mxu0 0
    %975 = vmatprep.subr.bf16.mxu0 0
    %976 = vmatpush1.bf16.msra.mxu0 0
    %977 = vmatprep.subr.bf16.mxu0 0
    %978 = vmatpush1.bf16.msra.mxu0 0
    %979 = vmatprep.mubr.bf16.mxu0 0
    %980 = vmatmul.mubr.bf16.gmra.mrb[0].mxu0 %v942
    %v981 = vpop.f32.mrb[0].mxu0
    %v982 = vadd.f32 0.0, %v981
    %v983 = vpop.f32.mrb[0].mxu0
    %v984 = vpop.f32.mrb[0].mxu0
    %v985 = vpop.f32.mrb[0].mxu0
    %986 = vdwg.mxu0
    %v988 = vunpack.c.l.b16 %v648
    %989 = vset.pattern.permute.xlu0 0
    %990 = vperm.xlu0 %989, %v988
    %v991 = vpop.permute.xlu0 %990
    %v992 = vlaneseq
    %v993 = vshrl.u32 %v992, 7
    %v994 = vsub.s32 %v437, %v993
    %v995 = vrot.slane %v991, %v994
    %v996 = vpack.c.b16 %v995, %v995
    %v998 = vsel %vm485, %v996, 0
    %v1001 = vsel %vm663, %v84, 0
    %1003 = vmatprep.subr.bf16.mxu0 0
    %1004 = vmatpush1.bf16.msra.mxu0 %v1001
    %1005 = vmatprep.subr.bf16.mxu0 0
    %1006 = vmatpush1.bf16.msra.mxu0 0
    %1007 = vmatprep.subr.bf16.mxu0 0
    %1008 = vmatpush1.bf16.msra.mxu0 0
    %1009 = vmatprep.subr.bf16.mxu0 0
    %1010 = vmatpush1.bf16.msra.mxu0 0
    %1011 = vmatprep.subr.bf16.mxu0 0
    %1012 = vmatpush1.bf16.msra.mxu0 0
    %1013 = vmatprep.subr.bf16.mxu0 0
    %1014 = vmatpush1.bf16.msra.mxu0 0
    %1015 = vmatprep.subr.bf16.mxu0 0
    %1016 = vmatpush1.bf16.msra.mxu0 0
    %1017 = vmatprep.subr.bf16.mxu0 0
    %1018 = vmatpush1.bf16.msra.mxu0 0
    %1019 = vmatprep.subr.bf16.mxu0 0
    %1020 = vmatpush1.bf16.msra.mxu0 0
    %1021 = vmatprep.subr.bf16.mxu0 0
    %1022 = vmatpush1.bf16.msra.mxu0 0
    %1023 = vmatprep.subr.bf16.mxu0 0
    %1024 = vmatpush1.bf16.msra.mxu0 0
    %1025 = vmatprep.subr.bf16.mxu0 0
    %1026 = vmatpush1.bf16.msra.mxu0 0
    %1027 = vmatprep.subr.bf16.mxu0 0
    %1028 = vmatpush1.bf16.msra.mxu0 0
    %1029 = vmatprep.subr.bf16.mxu0 0
    %1030 = vmatpush1.bf16.msra.mxu0 0
    %1031 = vmatprep.subr.bf16.mxu0 0
    %1032 = vmatpush1.bf16.msra.mxu0 0
    %1033 = vmatprep.subr.bf16.mxu0 0
    %1034 = vmatpush1.bf16.msra.mxu0 0
    %1035 = vmatprep.mubr.bf16.mxu0 0
    %1036 = vmatmul.mubr.bf16.gmra.mrb[0].mxu0 %v998
    %v1037 = vpop.f32.mrb[0].mxu0
    %v1038 = vadd.f32 0.0, %v1037
    %v1039 = vpop.f32.mrb[0].mxu0
    %v1040 = vpop.f32.mrb[0].mxu0
    %v1041 = vpop.f32.mrb[0].mxu0
    %1042 = vdwg.mxu0
    %v1044 = vunpack.c.l.b16 %v649
    %1045 = vset.pattern.permute.xlu0 0
    %1046 = vperm.xlu0 %1045, %v1044
    %v1047 = vpop.permute.xlu0 %1046
    %v1048 = vlaneseq
    %v1049 = vshrl.u32 %v1048, 7
    %v1050 = vsub.s32 %v437, %v1049
    %v1051 = vrot.slane %v1047, %v1050
    %v1052 = vpack.c.b16 %v1051, %v1051
    %v1054 = vsel %vm485, %v1052, 0
    %v1057 = vsel %vm663, %v85, 0
    %1059 = vmatprep.subr.bf16.mxu0 0
    %1060 = vmatpush1.bf16.msra.mxu0 %v1057
    %1061 = vmatprep.subr.bf16.mxu0 0
    %1062 = vmatpush1.bf16.msra.mxu0 0
    %1063 = vmatprep.subr.bf16.mxu0 0
    %1064 = vmatpush1.bf16.msra.mxu0 0
    %1065 = vmatprep.subr.bf16.mxu0 0
    %1066 = vmatpush1.bf16.msra.mxu0 0
    %1067 = vmatprep.subr.bf16.mxu0 0
    %1068 = vmatpush1.bf16.msra.mxu0 0
    %1069 = vmatprep.subr.bf16.mxu0 0
    %1070 = vmatpush1.bf16.msra.mxu0 0
    %1071 = vmatprep.subr.bf16.mxu0 0
    %1072 = vmatpush1.bf16.msra.mxu0 0
    %1073 = vmatprep.subr.bf16.mxu0 0
    %1074 = vmatpush1.bf16.msra.mxu0 0
    %1075 = vmatprep.subr.bf16.mxu0 0
    %1076 = vmatpush1.bf16.msra.mxu0 0
    %1077 = vmatprep.subr.bf16.mxu0 0
    %1078 = vmatpush1.bf16.msra.mxu0 0
    %1079 = vmatprep.subr.bf16.mxu0 0
    %1080 = vmatpush1.bf16.msra.mxu0 0
    %1081 = vmatprep.subr.bf16.mxu0 0
    %1082 = vmatpush1.bf16.msra.mxu0 0
    %1083 = vmatprep.subr.bf16.mxu0 0
    %1084 = vmatpush1.bf16.msra.mxu0 0
    %1085 = vmatprep.subr.bf16.mxu0 0
    %1086 = vmatpush1.bf16.msra.mxu0 0
    %1087 = vmatprep.subr.bf16.mxu0 0
    %1088 = vmatpush1.bf16.msra.mxu0 0
    %1089 = vmatprep.subr.bf16.mxu0 0
    %1090 = vmatpush1.bf16.msra.mxu0 0
    %1091 = vmatprep.mubr.bf16.mxu0 0
    %1092 = vmatmul.mubr.bf16.gmra.mrb[0].mxu0 %v1054
    %v1093 = vpop.f32.mrb[0].mxu0
    %v1094 = vadd.f32 0.0, %v1093
    %v1095 = vpop.f32.mrb[0].mxu0
    %v1096 = vpop.f32.mrb[0].mxu0
    %v1097 = vpop.f32.mrb[0].mxu0
    %1098 = vdwg.mxu0
    %v1099 = vld [vmem:[#allocation10] sm:$0xff]
    %1101 = vset.pattern.permute.xlu0 0
    %1102 = vperm.xlu0 %1101, %v492
    %v1103 = vpop.permute.xlu0 %1102
    %v1105 = vmul.f32 %v1103, %v1099
    %v1114 = vrot.slane %v758, 7
    %v1115 = vsel %vm470, %v1114, %v702
    %v1116 = vrot.slane %v814, 6
    %v1117 = vsel %vm472, %v1116, %v1115
    %v1118 = vrot.slane %v870, 5
    %v1119 = vsel %vm474, %v1118, %v1117
    %v1120 = vrot.slane %v926, 4
    %v1121 = vsel %vm476, %v1120, %v1119
    %v1122 = vrot.slane %v982, 3
    %v1123 = vsel %vm478, %v1122, %v1121
    %v1124 = vrot.slane %v1038, 2
    %v1125 = vsel %vm480, %v1124, %v1123
    %v1126 = vrot.slane %v1094, 1
    %v1127 = vsel %vm482, %v1126, %v1125
    %v1129 = vadd.f32 %v1105, %v1127
    %1130 = vst.msk [vmem:[#allocation10] sm:$0xff] %vm129, %v1129
    // Predicated region
    $region38: #{tpu_custom_call.1} parent=1 // pred_check
      %p1131 = pneg %p61
    $region39: #{tpu_custom_call.1} parent=1 // pred_check_branch
      %1133 = sbr.rel (%p1131) target = $region41
    $region40: #{tpu_custom_call.1} parent=1 // pred_region
      %v1134 = vld [vmem:[#allocation10] sm:$0xff]
      %v1135 = vld [vmem:[#allocation3] sm:$0xff]
      %v1136 = vrcp.pop %v1135
      %1138 = vset.pattern.permute.xlu0 0
      %1139 = vperm.xlu0 %1138, %v1136
      %v1140 = vpop.permute.xlu0 %1139
      %v1142 = vmul.f32 %v1134, %v1140
      %1143 = vst.msk [vmem:[#allocation10] sm:$0xff] %vm129, %v1142
    $region41: #{tpu_custom_call.1} parent=1 // pred_fallthru
      _
    // Predicated region
    $region42: #{tpu_custom_call.1} parent=1 // pred_check
      _
    $region43: #{tpu_custom_call.1} parent=1 // pred_check_branch
      %1145 = sbr.rel (0) target = $region45
    $region44: #{tpu_custom_call.1} parent=1 // pred_region
      %s1147 = ssub.s32 128, 128
      %1148 = vsyncadd [#allocation6], %s1147
      %s1150 = sshll.u32 [#allocation10], 4
      %s1151 = int_to_ptr.vmem [resolvable:$true] %s1150
      %1153 = dma.vmem_to_hbm [thread:$0]  %s1151, 128, %s5, [#allocation6]
    $region45: #{tpu_custom_call.1} parent=1 // pred_fallthru
      _
    // Predicated region
    $region46: #{tpu_custom_call.1} parent=1 // pred_check
      _
    $region47: #{tpu_custom_call.1} parent=1 // pred_check_branch
      %1155 = sbr.rel (0) target = $region49
    $region48: #{tpu_custom_call.1} parent=1 // pred_region
      %1156 = dma.done [#allocation6], 128
    $region49: #{tpu_custom_call.1} parent=1 // pred_fallthru
      _
    %1157 = vsyncpa [#allocation5], 1
    %1158 = vsyncpa [#allocation8], 1
    %1159 = vsyncpa [#allocation6], 1

// kernel: tpu_custom_call.1
$region0: #{tpu_custom_call.1}
  #allocation0 [shape = 'u32[]', space=smem, size = 0x4, offset = 0x4, fixed_abs, tag = 'smem constant byte address 0x4 - core index']
  #allocation1 [shape = 'u32[144,128]{1,0:T(1,128)}', space=vmem, size = 0x12000, scoped, tag = 'internal scratch']
  #allocation2 [shape = 'f32[8,1]{1,0:T(8,128)}', space=vmem, size = 0x1000, scoped, tag = 'scratch operand']
  #allocation3 [shape = 'f32[8,1]{1,0:T(8,128)}', space=vmem, size = 0x1000, scoped, tag = 'scratch operand']
  %s0 = inlined_call_operand.hbm [shape: f32[8,8,32], index: 0, kind: input, shape index: {}]
  %s1 = inlined_call_operand.hbm [shape: f32[8,8], index: 1, kind: input, shape index: {}]
  %s2 = inlined_call_operand.hbm [shape: bf16[32,32], index: 2, kind: input, shape index: {}]
  %s3 = inlined_call_operand.vmem [shape: f32[1,32], index: 3, kind: input, shape index: {}]
  %s4 = inlined_call_operand.vmem [shape: f32[1,32], index: 4, kind: input, shape index: {}]
  %s5 = inlined_call_operand.hbm [shape: f32[8,32], index: 5, kind: output, shape index: {}]
  %s6 = sld [smem:[#allocation0]]
  $region50: #{tpu_custom_call.1} parent=0
    _
  %s8 = ssub.s32 1, %s6
  %s9 = scalar_select 0, %s8, %s6
  $region1: #{tpu_custom_call.1} parent=0
    #allocation4 [shape = 'u8[32768]{0}', space=vmem, size = 0x8000, scoped, tag = 'input window, operand 0, single buffered']
    #allocation5 [shape = 's32[1]{0}', space=sflag, size = 0x4, scoped, tag = 'scoped memory for tpu_custom_call.1']
    #allocation6 [shape = 's32[1]{0}', space=sflag, size = 0x4, scoped, tag = 'scoped memory for tpu_custom_call.1']
    #allocation7 [shape = 'u8[4096]{0}', space=vmem, size = 0x1000, scoped, tag = 'input window, operand 1, single buffered']
    #allocation8 [shape = 's32[1]{0}', space=sflag, size = 0x4, scoped, tag = 'scoped memory for tpu_custom_call.1']
    #allocation9 [shape = 'u8[8192]{0}', space=vmem, size = 0x2000, scoped, tag = 'input window, operand 2, single buffered']
    #allocation10 [shape = 'u8[4096]{0}', space=vmem, size = 0x1000, scoped, tag = 'output window, operand 0, single buffered']
    %10 = vsyncpa [#allocation5], 0
    %11 = vsyncpa [#allocation8], 0
    %12 = vsyncpa [#allocation6], 0
    // Predicated region
    $region2: #{tpu_custom_call.1} parent=1 // pred_check
      _
    $region3: #{tpu_custom_call.1} parent=1 // pred_check_branch
      %14 = sbr.rel (0) target = $region5
    $region4: #{tpu_custom_call.1} parent=1 // pred_region
      %s16 = ssub.s32 1024, 1024
      %17 = vsyncadd [#allocation5], %s16
      %s18 = sshll.u32 [#allocation4], 4
      %s19 = int_to_ptr.vmem [resolvable:$true] %s18
      %24 = dma.hbm_to_vmem [thread:$0]  %s0, 1024, %s19, [#allocation5], 128, 128, 8
    $region5: #{tpu_custom_call.1} parent=1 // pred_fallthru
      _
    // Predicated region
    $region6: #{tpu_custom_call.1} parent=1 // pred_check
      _
    $region7: #{tpu_custom_call.1} parent=1 // pred_check_branch
      %26 = sbr.rel (0) target = $region9
    $region8: #{tpu_custom_call.1} parent=1 // pred_region
      %s28 = ssub.s32 128, 128
      %29 = vsyncadd [#allocation8], %s28
      %s31 = sshll.u32 [#allocation7], 4
      %s32 = int_to_ptr.vmem [resolvable:$true] %s31
      %34 = dma.hbm_to_vmem [thread:$0]  %s1, 128, %s32, [#allocation8]
    $region9: #{tpu_custom_call.1} parent=1 // pred_fallthru
      _
    // Predicated region
    $region10: #{tpu_custom_call.1} parent=1 // pred_check
      _
    $region11: #{tpu_custom_call.1} parent=1 // pred_check_branch
      %36 = sbr.rel (0) target = $region13
    $region12: #{tpu_custom_call.1} parent=1 // pred_region
      %s38 = ssub.s32 256, 256
      %39 = vsyncadd [#allocation8], %s38
      %s40 = sshll.u32 [#allocation9], 4
      %s41 = int_to_ptr.vmem [resolvable:$true] %s40
      %46 = dma.hbm_to_vmem [thread:$0]  %s2, 256, %s41, [#allocation8], 64, 64, 4
    $region13: #{tpu_custom_call.1} parent=1 // pred_fallthru
      _
    // Predicated region
    $region14: #{tpu_custom_call.1} parent=1 // pred_check
      _
    $region15: #{tpu_custom_call.1} parent=1 // pred_check_branch
      %48 = sbr.rel (0) target = $region17
    $region16: #{tpu_custom_call.1} parent=1 // pred_region
      _
    $region17: #{tpu_custom_call.1} parent=1 // pred_fallthru
      _
    // Predicated region
    $region18: #{tpu_custom_call.1} parent=1 // pred_check
      _
    $region19: #{tpu_custom_call.1} parent=1 // pred_check_branch
      %50 = sbr.rel (0) target = $region21
    $region20: #{tpu_custom_call.1} parent=1 // pred_region
      _
    $region21: #{tpu_custom_call.1} parent=1 // pred_fallthru
      _
    // Predicated region
    $region22: #{tpu_custom_call.1} parent=1 // pred_check
      _
    $region23: #{tpu_custom_call.1} parent=1 // pred_check_branch
      %52 = sbr.rel (0) target = $region25
    $region24: #{tpu_custom_call.1} parent=1 // pred_region
      %53 = dma.done [#allocation5], 1024
    $region25: #{tpu_custom_call.1} parent=1 // pred_fallthru
      _
    // Predicated region
    $region26: #{tpu_custom_call.1} parent=1 // pred_check
      _
    $region27: #{tpu_custom_call.1} parent=1 // pred_check_branch
      %55 = sbr.rel (0) target = $region29
    $region28: #{tpu_custom_call.1} parent=1 // pred_region
      %56 = dma.done [#allocation8], 128
    $region29: #{tpu_custom_call.1} parent=1 // pred_fallthru
      _
    // Predicated region
    $region30: #{tpu_custom_call.1} parent=1 // pred_check
      _
    $region31: #{tpu_custom_call.1} parent=1 // pred_check_branch
      %58 = sbr.rel (0) target = $region33
    $region32: #{tpu_custom_call.1} parent=1 // pred_region
      %59 = dma.done [#allocation8], 256
    $region33: #{tpu_custom_call.1} parent=1 // pred_fallthru
      _
    %p61 = scmp.eq.s32.totalorder 0, 0
    // Predicated region
    $region34: #{tpu_custom_call.1} parent=1 // pred_check
      %p62 = pneg %p61
    $region35: #{tpu_custom_call.1} parent=1 // pred_check_branch
      %64 = sbr.rel (%p62) target = $region37
    $region36: #{tpu_custom_call.1} parent=1 // pred_region
      %vm65 = vcmask 7168
      %66 = vst.msk [vmem:[#allocation2] sm:$0xff] %vm65, -inf
      %67 = vst.msk [vmem:[#allocation3] sm:$0xff] %vm65, 0.0
      %vm68 = vcmask 261120
      %69 = vst.msk [vmem:[#allocation10] sm:$0xff] %vm68, 0.0
    $region37: #{tpu_custom_call.1} parent=1 // pred_fallthru
      _
    %v70 = vld [vmem:[#allocation4] sm:$0xff]
    %v71 = vld [vmem:[#allocation4 + $0x8] sm:$0xff]
    %v72 = vld [vmem:[#allocation4 + $0x10] sm:$0xff]
    %v73 = vld [vmem:[#allocation4 + $0x18] sm:$0xff]
    %v74 = vld [vmem:[#allocation4 + $0x20] sm:$0xff]
    %v75 = vld [vmem:[#allocation4 + $0x28] sm:$0xff]
    %v76 = vld [vmem:[#allocation4 + $0x30] sm:$0xff]
    %v77 = vld [vmem:[#allocation4 + $0x38] sm:$0xff]
    %v78 = vpack.c.bf16 %v70, %v70
    %v79 = vpack.c.bf16 %v71, %v71
    %v80 = vpack.c.bf16 %v72, %v72
    %v81 = vpack.c.bf16 %v73, %v73
    %v82 = vpack.c.bf16 %v74, %v74
    %v83 = vpack.c.bf16 %v75, %v75
    %v84 = vpack.c.bf16 %v76, %v76
    %v85 = vpack.c.bf16 %v77, %v77
    %v86 = vld [vmem:[#allocation9] sm:$0xf]
    %v87 = vld [vmem:[#allocation9 + $0x4] sm:$0xf]
    %v88 = vld [vmem:[#allocation9 + $0x8] sm:$0xf]
    %v89 = vld [vmem:[#allocation9 + $0xc] sm:$0xf]
    %v90 = vld [vmem:[%s3] sm:$0x1]
    %v92 = vlaneseq
    %v93 = vshrl.u32 %v92, 7
    %v94 = vsub.s32 0, %v93
    %v95 = vrot.slane %v90, %v94
    %v105 = vunpack.c.l.b16 %v78
    %v106 = vunpack.c.l.b16 %v79
    %v107 = vunpack.c.l.b16 %v80
    %v108 = vunpack.c.l.b16 %v81
    %v109 = vunpack.c.l.b16 %v82
    %v110 = vunpack.c.l.b16 %v83
    %v111 = vunpack.c.l.b16 %v84
    %v112 = vunpack.c.l.b16 %v85
    %v113 = vpack.c.b16 %v106, %v105
    %v114 = vpack.c.b16 %v108, %v107
    %v115 = vpack.c.b16 %v110, %v109
    %v116 = vpack.c.b16 %v112, %v111
    %v121 = vunpack.c.l.b16 %v86
    %v122 = vunpack.c.l.b16 %v87
    %v123 = vunpack.c.l.b16 %v88
    %v124 = vunpack.c.l.b16 %v89
    %v125 = vpack.c.b16 %v122, %v121
    %v126 = vpack.c.b16 %v124, %v123
    %vm129 = vcmask 261120
    %v131 = vsel %vm129, %v113, 0
    %v134 = vsel %vm129, %v114, 0
    %v137 = vsel %vm129, %v115, 0
    %v140 = vsel %vm129, %v116, 0
    %142 = vmatprep.subr.bf16.mxu0 0
    %143 = vmatpush1.bf16.msra.mxu0 %v125
    %144 = vmatprep.subr.bf16.mxu0 0
    %145 = vmatpush1.bf16.msra.mxu0 %v126
    %146 = vmatprep.subr.bf16.mxu0 0
    %147 = vmatpush1.bf16.msra.mxu0 0
    %148 = vmatprep.subr.bf16.mxu0 0
    %149 = vmatpush1.bf16.msra.mxu0 0
    %150 = vmatprep.subr.bf16.mxu0 0
    %151 = vmatpush1.bf16.msra.mxu0 0
    %152 = vmatprep.subr.bf16.mxu0 0
    %153 = vmatpush1.bf16.msra.mxu0 0
    %154 = vmatprep.subr.bf16.mxu0 0
    %155 = vmatpush1.bf16.msra.mxu0 0
    %156 = vmatprep.subr.bf16.mxu0 0
    %157 = vmatpush1.bf16.msra.mxu0 0
    %158 = vmatprep.subr.bf16.mxu0 0
    %159 = vmatpush1.bf16.msra.mxu0 0
    %160 = vmatprep.subr.bf16.mxu0 0
    %161 = vmatpush1.bf16.msra.mxu0 0
    %162 = vmatprep.subr.bf16.mxu0 0
    %163 = vmatpush1.bf16.msra.mxu0 0
    %164 = vmatprep.subr.bf16.mxu0 0
    %165 = vmatpush1.bf16.msra.mxu0 0
    %166 = vmatprep.subr.bf16.mxu0 0
    %167 = vmatpush1.bf16.msra.mxu0 0
    %168 = vmatprep.subr.bf16.mxu0 0
    %169 = vmatpush1.bf16.msra.mxu0 0
    %170 = vmatprep.subr.bf16.mxu0 0
    %171 = vmatpush1.bf16.msra.mxu0 0
    %172 = vmatprep.subr.bf16.mxu0 0
    %173 = vmatpush1.bf16.msra.mxu0 0
    %174 = vmatprep.mubr.bf16.mxu0 0
    %175 = vmatmul.mubr.bf16.gmra.mrb[0].mxu0 %v131
    %v176 = vpop.f32.mrb[0].mxu0
    %v177 = vadd.f32 %v95, %v176
    %v178 = vpop.f32.mrb[0].mxu0
    %v179 = vpop.f32.mrb[0].mxu0
    %v180 = vadd.f32 %v95, %v179
    %v181 = vpop.f32.mrb[0].mxu0
    %182 = vmatprep.mubr.bf16.mxu0 0
    %183 = vmatmul.mubr.bf16.gmra.mrb[0].mxu0 %v134
    %v184 = vpop.f32.mrb[0].mxu0
    %v185 = vadd.f32 %v95, %v184
    %v186 = vpop.f32.mrb[0].mxu0
    %v187 = vpop.f32.mrb[0].mxu0
    %v188 = vadd.f32 %v95, %v187
    %v189 = vpop.f32.mrb[0].mxu0
    %190 = vmatprep.mubr.bf16.mxu0 0
    %191 = vmatmul.mubr.bf16.gmra.mrb[0].mxu0 %v137
    %v192 = vpop.f32.mrb[0].mxu0
    %v193 = vadd.f32 %v95, %v192
    %v194 = vpop.f32.mrb[0].mxu0
    %v195 = vpop.f32.mrb[0].mxu0
    %v196 = vadd.f32 %v95, %v195
    %v197 = vpop.f32.mrb[0].mxu0
    %198 = vmatprep.mubr.bf16.mxu0 0
    %199 = vmatmul.mubr.bf16.gmra.mrb[0].mxu0 %v140
    %v200 = vpop.f32.mrb[0].mxu0
    %v201 = vadd.f32 %v95, %v200
    %v202 = vpop.f32.mrb[0].mxu0
    %v203 = vpop.f32.mrb[0].mxu0
    %v204 = vadd.f32 %v95, %v203
    %v205 = vpop.f32.mrb[0].mxu0
    %206 = vdwg.mxu0
    %v207 = vtanh.pop %v177
    %v208 = vtanh.pop %v180
    %v209 = vtanh.pop %v185
    %v210 = vtanh.pop %v188
    %v211 = vtanh.pop %v193
    %v212 = vtanh.pop %v196
    %v213 = vtanh.pop %v201
    %v214 = vtanh.pop %v204
    %v215 = vld [vmem:[%s4] sm:$0x1]
    %v217 = vlaneseq
    %v218 = vshrl.u32 %v217, 7
    %v219 = vsub.s32 0, %v218
    %v220 = vrot.slane %v215, %v219
    %v222 = vmul.f32 %v207, %v220
    %v223 = vmul.f32 %v208, %v220
    %v224 = vmul.f32 %v209, %v220
    %v225 = vmul.f32 %v210, %v220
    %v226 = vmul.f32 %v211, %v220
    %v227 = vmul.f32 %v212, %v220
    %v228 = vmul.f32 %v213, %v220
    %v229 = vmul.f32 %v214, %v220
    %v230 = vsel %vm129, %v222, 0.0
    %231 = vadd.xlane.f32.xlu0 %v230
    %v232 = vpop.xlane.xlu0 %231
    %v233 = vsel %vm129, %v223, 0.0
    %234 = vadd.xlane.f32.xlu0 %v233
    %v235 = vpop.xlane.xlu0 %234
    %v236 = vsel %vm129, %v224, 0.0
    %237 = vadd.xlane.f32.xlu0 %v236
    %v238 = vpop.xlane.xlu0 %237
    %v239 = vsel %vm129, %v225, 0.0
    %240 = vadd.xlane.f32.xlu0 %v239
    %v241 = vpop.xlane.xlu0 %240
    %v242 = vsel %vm129, %v226, 0.0
    %243 = vadd.xlane.f32.xlu0 %v242
    %v244 = vpop.xlane.xlu0 %243
    %v245 = vsel %vm129, %v227, 0.0
    %246 = vadd.xlane.f32.xlu0 %v245
    %v247 = vpop.xlane.xlu0 %246
    %v248 = vsel %vm129, %v228, 0.0
    %249 = vadd.xlane.f32.xlu0 %v248
    %v250 = vpop.xlane.xlu0 %249
    %v251 = vsel %vm129, %v229, 0.0
    %252 = vadd.xlane.f32.xlu0 %v251
    %v253 = vpop.xlane.xlu0 %252
    %v254 = vld [vmem:[#allocation7] sm:$0xff]
    %v256 = vlaneseq
    %v257 = vshrl.u32 %v256, 7
    %v258 = vsub.s32 0, %v257
    %v259 = vrot.slane %v254, %v258
    %261 = vbcast.lane.b32.xlu0 %v259, 256
    %v262 = vpop.permute.xlu0 %261
    %v263 = vlaneseq
    %v264 = vshrl.u32 %v263, 7
    %v265 = vsub.s32 1, %v264
    %v266 = vrot.slane %v254, %v265
    %268 = vbcast.lane.b32.xlu0 %v266, 256
    %v269 = vpop.permute.xlu0 %268
    %v270 = vlaneseq
    %v271 = vshrl.u32 %v270, 7
    %v272 = vsub.s32 2, %v271
    %v273 = vrot.slane %v254, %v272
    %275 = vbcast.lane.b32.xlu0 %v273, 256
    %v276 = vpop.permute.xlu0 %275
    %v277 = vlaneseq
    %v278 = vshrl.u32 %v277, 7
    %v279 = vsub.s32 3, %v278
    %v280 = vrot.slane %v254, %v279
    %282 = vbcast.lane.b32.xlu0 %v280, 256
    %v283 = vpop.permute.xlu0 %282
    %v284 = vlaneseq
    %v285 = vshrl.u32 %v284, 7
    %v286 = vsub.s32 4, %v285
    %v287 = vrot.slane %v254, %v286
    %289 = vbcast.lane.b32.xlu0 %v287, 256
    %v290 = vpop.permute.xlu0 %289
    %v291 = vlaneseq
    %v292 = vshrl.u32 %v291, 7
    %v293 = vsub.s32 5, %v292
    %v294 = vrot.slane %v254, %v293
    %296 = vbcast.lane.b32.xlu0 %v294, 256
    %v297 = vpop.permute.xlu0 %296
    %v298 = vlaneseq
    %v299 = vshrl.u32 %v298, 7
    %v300 = vsub.s32 6, %v299
    %v301 = vrot.slane %v254, %v300
    %303 = vbcast.lane.b32.xlu0 %v301, 256
    %v304 = vpop.permute.xlu0 %303
    %v305 = vlaneseq
    %v306 = vshrl.u32 %v305, 7
    %v307 = vsub.s32 7, %v306
    %v308 = vrot.slane %v254, %v307
    %310 = vbcast.lane.b32.xlu0 %v308, 256
    %v311 = vpop.permute.xlu0 %310
    %v320 = vmul.f32 %v232, %v262
    %v321 = vmul.f32 %v235, %v269
    %v322 = vmul.f32 %v238, %v276
    %v323 = vmul.f32 %v241, %v283
    %v324 = vmul.f32 %v244, %v290
    %v325 = vmul.f32 %v247, %v297
    %v326 = vmul.f32 %v250, %v304
    %v327 = vmul.f32 %v253, %v311
    %v328 = vsub.f32 1.0, %v254
    %v329 = vmul.f32 %v328, -10000.0
    %v331 = vlaneseq
    %v332 = vshrl.u32 %v331, 7
    %v333 = vsub.s32 0, %v332
    %v334 = vrot.slane %v329, %v333
    %336 = vbcast.lane.b32.xlu0 %v334, 256
    %v337 = vpop.permute.xlu0 %336
    %v338 = vlaneseq
    %v339 = vshrl.u32 %v338, 7
    %v340 = vsub.s32 1, %v339
    %v341 = vrot.slane %v329, %v340
    %343 = vbcast.lane.b32.xlu0 %v341, 256
    %v344 = vpop.permute.xlu0 %343
    %v345 = vlaneseq
    %v346 = vshrl.u32 %v345, 7
    %v347 = vsub.s32 2, %v346
    %v348 = vrot.slane %v329, %v347
    %350 = vbcast.lane.b32.xlu0 %v348, 256
    %v351 = vpop.permute.xlu0 %350
    %v352 = vlaneseq
    %v353 = vshrl.u32 %v352, 7
    %v354 = vsub.s32 3, %v353
    %v355 = vrot.slane %v329, %v354
    %357 = vbcast.lane.b32.xlu0 %v355, 256
    %v358 = vpop.permute.xlu0 %357
    %v359 = vlaneseq
    %v360 = vshrl.u32 %v359, 7
    %v361 = vsub.s32 4, %v360
    %v362 = vrot.slane %v329, %v361
    %364 = vbcast.lane.b32.xlu0 %v362, 256
    %v365 = vpop.permute.xlu0 %364
    %v366 = vlaneseq
    %v367 = vshrl.u32 %v366, 7
    %v368 = vsub.s32 5, %v367
    %v369 = vrot.slane %v329, %v368
    %371 = vbcast.lane.b32.xlu0 %v369, 256
    %v372 = vpop.permute.xlu0 %371
    %v373 = vlaneseq
    %v374 = vshrl.u32 %v373, 7
    %v375 = vsub.s32 6, %v374
    %v376 = vrot.slane %v329, %v375
    %378 = vbcast.lane.b32.xlu0 %v376, 256
    %v379 = vpop.permute.xlu0 %378
    %v380 = vlaneseq
    %v381 = vshrl.u32 %v380, 7
    %v382 = vsub.s32 7, %v381
    %v383 = vrot.slane %v329, %v382
    %385 = vbcast.lane.b32.xlu0 %v383, 256
    %v386 = vpop.permute.xlu0 %385
    %v395 = vadd.f32 %v320, %v337
    %v396 = vadd.f32 %v321, %v344
    %v397 = vadd.f32 %v322, %v351
    %v398 = vadd.f32 %v323, %v358
    %v399 = vadd.f32 %v324, %v365
    %v400 = vadd.f32 %v325, %v372
    %v401 = vadd.f32 %v326, %v379
    %v402 = vadd.f32 %v327, %v386
    %v403 = vld [vmem:[#allocation2] sm:$0xff]
    %412 = vset.pattern.permute.xlu0 0
    %413 = vperm.xlu0 %412, %v395
    %v414 = vpop.permute.xlu0 %413
    %415 = vset.pattern.permute.xlu0 0
    %416 = vperm.xlu0 %415, %v396
    %v417 = vpop.permute.xlu0 %416
    %418 = vset.pattern.permute.xlu0 0
    %419 = vperm.xlu0 %418, %v397
    %v420 = vpop.permute.xlu0 %419
    %421 = vset.pattern.permute.xlu0 0
    %422 = vperm.xlu0 %421, %v398
    %v423 = vpop.permute.xlu0 %422
    %424 = vset.pattern.permute.xlu0 0
    %425 = vperm.xlu0 %424, %v399
    %v426 = vpop.permute.xlu0 %425
    %427 = vset.pattern.permute.xlu0 0
    %428 = vperm.xlu0 %427, %v400
    %v429 = vpop.permute.xlu0 %428
    %430 = vset.pattern.permute.xlu0 0
    %431 = vperm.xlu0 %430, %v401
    %v432 = vpop.permute.xlu0 %431
    %433 = vset.pattern.permute.xlu0 0
    %434 = vperm.xlu0 %433, %v402
    %v435 = vpop.permute.xlu0 %434
    %v436 = vlaneseq
    %v437 = vand.u32 %v436, 127
    %v438 = vlaneseq
    %v439 = vshrl.u32 %v438, 7
    %v440 = vsub.s32 %v437, %v439
    %v441 = vrot.slane %v414, %v440
    %v442 = vlaneseq
    %v443 = vshrl.u32 %v442, 7
    %v444 = vsub.s32 %v437, %v443
    %v445 = vrot.slane %v417, %v444
    %v446 = vlaneseq
    %v447 = vshrl.u32 %v446, 7
    %v448 = vsub.s32 %v437, %v447
    %v449 = vrot.slane %v420, %v448
    %v450 = vlaneseq
    %v451 = vshrl.u32 %v450, 7
    %v452 = vsub.s32 %v437, %v451
    %v453 = vrot.slane %v423, %v452
    %v454 = vlaneseq
    %v455 = vshrl.u32 %v454, 7
    %v456 = vsub.s32 %v437, %v455
    %v457 = vrot.slane %v426, %v456
    %v458 = vlaneseq
    %v459 = vshrl.u32 %v458, 7
    %v460 = vsub.s32 %v437, %v459
    %v461 = vrot.slane %v429, %v460
    %v462 = vlaneseq
    %v463 = vshrl.u32 %v462, 7
    %v464 = vsub.s32 %v437, %v463
    %v465 = vrot.slane %v432, %v464
    %v466 = vlaneseq
    %v467 = vshrl.u32 %v466, 7
    %v468 = vsub.s32 %v437, %v467
    %v469 = vrot.slane %v435, %v468
    %vm470 = vcmask 1041409
    %v471 = vsel %vm470, %v445, %v441
    %vm472 = vcmask 1042434
    %v473 = vsel %vm472, %v449, %v471
    %vm474 = vcmask 1043459
    %v475 = vsel %vm474, %v453, %v473
    %vm476 = vcmask 1044484
    %v477 = vsel %vm476, %v457, %v475
    %vm478 = vcmask 1045509
    %v479 = vsel %vm478, %v461, %v477
    %vm480 = vcmask 1046534
    %v481 = vsel %vm480, %v465, %v479
    %vm482 = vcmask 1047559
    %v483 = vsel %vm482, %v469, %v481
    %vm485 = vcmask 64512
    %v486 = vsel %vm485, %v483, -inf
    %487 = vmax.xlane.f32.xlu0 %v486
    %v488 = vpop.xlane.xlu0 %487
    %v489 = vmax.f32 %v403, %v488
    %v490 = vsub.f32 %v403, %v489
    %v491 = vmul.f32 %v490, 1.442695
    %v492 = vpow.pop %v491
    %494 = vset.pattern.permute.xlu0 0
    %495 = vperm.xlu0 %494, %v489
    %v496 = vpop.permute.xlu0 %495
    %v497 = vlaneseq
    %v498 = vshrl.u32 %v497, 7
    %v499 = vsub.s32 0, %v498
    %v500 = vrot.slane %v496, %v499
    %v501 = vlaneseq
    %v502 = vshrl.u32 %v501, 7
    %v503 = vsub.s32 1, %v502
    %v504 = vrot.slane %v496, %v503
    %v505 = vlaneseq
    %v506 = vshrl.u32 %v505, 7
    %v507 = vsub.s32 2, %v506
    %v508 = vrot.slane %v496, %v507
    %v509 = vlaneseq
    %v510 = vshrl.u32 %v509, 7
    %v511 = vsub.s32 3, %v510
    %v512 = vrot.slane %v496, %v511
    %v513 = vlaneseq
    %v514 = vshrl.u32 %v513, 7
    %v515 = vsub.s32 4, %v514
    %v516 = vrot.slane %v496, %v515
    %v517 = vlaneseq
    %v518 = vshrl.u32 %v517, 7
    %v519 = vsub.s32 5, %v518
    %v520 = vrot.slane %v496, %v519
    %v521 = vlaneseq
    %v522 = vshrl.u32 %v521, 7
    %v523 = vsub.s32 6, %v522
    %v524 = vrot.slane %v496, %v523
    %v525 = vlaneseq
    %v526 = vshrl.u32 %v525, 7
    %v527 = vsub.s32 7, %v526
    %v528 = vrot.slane %v496, %v527
    %v537 = vsub.f32 %v395, %v500
    %v538 = vsub.f32 %v396, %v504
    %v539 = vsub.f32 %v397, %v508
    %v540 = vsub.f32 %v398, %v512
    %v541 = vsub.f32 %v399, %v516
    %v542 = vsub.f32 %v400, %v520
    %v543 = vsub.f32 %v401, %v524
    %v544 = vsub.f32 %v402, %v528
    %v545 = vmul.f32 %v537, 1.442695
    %v546 = vpow.pop %v545
    %v547 = vmul.f32 %v538, 1.442695
    %v548 = vpow.pop %v547
    %v549 = vmul.f32 %v539, 1.442695
    %v550 = vpow.pop %v549
    %v551 = vmul.f32 %v540, 1.442695
    %v552 = vpow.pop %v551
    %v553 = vmul.f32 %v541, 1.442695
    %v554 = vpow.pop %v553
    %v555 = vmul.f32 %v542, 1.442695
    %v556 = vpow.pop %v555
    %v557 = vmul.f32 %v543, 1.442695
    %v558 = vpow.pop %v557
    %v559 = vmul.f32 %v544, 1.442695
    %v560 = vpow.pop %v559
    %v561 = vld [vmem:[#allocation3] sm:$0xff]
    %v562 = vmul.f32 %v492, %v561
    %571 = vset.pattern.permute.xlu0 0
    %572 = vperm.xlu0 %571, %v546
    %v573 = vpop.permute.xlu0 %572
    %574 = vset.pattern.permute.xlu0 0
    %575 = vperm.xlu0 %574, %v548
    %v576 = vpop.permute.xlu0 %575
    %577 = vset.pattern.permute.xlu0 0
    %578 = vperm.xlu0 %577, %v550
    %v579 = vpop.permute.xlu0 %578
    %580 = vset.pattern.permute.xlu0 0
    %581 = vperm.xlu0 %580, %v552
    %v582 = vpop.permute.xlu0 %581
    %583 = vset.pattern.permute.xlu0 0
    %584 = vperm.xlu0 %583, %v554
    %v585 = vpop.permute.xlu0 %584
    %586 = vset.pattern.permute.xlu0 0
    %587 = vperm.xlu0 %586, %v556
    %v588 = vpop.permute.xlu0 %587
    %589 = vset.pattern.permute.xlu0 0
    %590 = vperm.xlu0 %589, %v558
    %v591 = vpop.permute.xlu0 %590
    %592 = vset.pattern.permute.xlu0 0
    %593 = vperm.xlu0 %592, %v560
    %v594 = vpop.permute.xlu0 %593
    %v595 = vlaneseq
    %v596 = vshrl.u32 %v595, 7
    %v597 = vsub.s32 %v437, %v596
    %v598 = vrot.slane %v573, %v597
    %v599 = vlaneseq
    %v600 = vshrl.u32 %v599, 7
    %v601 = vsub.s32 %v437, %v600
    %v602 = vrot.slane %v576, %v601
    %v603 = vlaneseq
    %v604 = vshrl.u32 %v603, 7
    %v605 = vsub.s32 %v437, %v604
    %v606 = vrot.slane %v579, %v605
    %v607 = vlaneseq
    %v608 = vshrl.u32 %v607, 7
    %v609 = vsub.s32 %v437, %v608
    %v610 = vrot.slane %v582, %v609
    %v611 = vlaneseq
    %v612 = vshrl.u32 %v611, 7
    %v613 = vsub.s32 %v437, %v612
    %v614 = vrot.slane %v585, %v613
    %v615 = vlaneseq
    %v616 = vshrl.u32 %v615, 7
    %v617 = vsub.s32 %v437, %v616
    %v618 = vrot.slane %v588, %v617
    %v619 = vlaneseq
    %v620 = vshrl.u32 %v619, 7
    %v621 = vsub.s32 %v437, %v620
    %v622 = vrot.slane %v591, %v621
    %v623 = vlaneseq
    %v624 = vshrl.u32 %v623, 7
    %v625 = vsub.s32 %v437, %v624
    %v626 = vrot.slane %v594, %v625
    %v627 = vsel %vm470, %v602, %v598
    %v628 = vsel %vm472, %v606, %v627
    %v629 = vsel %vm474, %v610, %v628
    %v630 = vsel %vm476, %v614, %v629
    %v631 = vsel %vm478, %v618, %v630
    %v632 = vsel %vm480, %v622, %v631
    %v633 = vsel %vm482, %v626, %v632
    %v635 = vsel %vm485, %v633, 0.0
    %636 = vadd.xlane.f32.xlu0 %v635
    %v637 = vpop.xlane.xlu0 %636
    %v638 = vadd.f32 %v562, %v637
    %vm639 = vcmask 7168
    %640 = vst.msk [vmem:[#allocation3] sm:$0xff] %vm639, %v638
    %641 = vst.msk [vmem:[#allocation2] sm:$0xff] %vm639, %v489
    %v642 = vpack.c.bf16 %v546, %v546
    %v643 = vpack.c.bf16 %v548, %v548
    %v644 = vpack.c.bf16 %v550, %v550
    %v645 = vpack.c.bf16 %v552, %v552
    %v646 = vpack.c.bf16 %v554, %v554
    %v647 = vpack.c.bf16 %v556, %v556
    %v648 = vpack.c.bf16 %v558, %v558
    %v649 = vpack.c.bf16 %v560, %v560
    %v651 = vunpack.c.l.b16 %v642
    %652 = vset.pattern.permute.xlu0 0
    %653 = vperm.xlu0 %652, %v651
    %v654 = vpop.permute.xlu0 %653
    %v655 = vlaneseq
    %v656 = vshrl.u32 %v655, 7
    %v657 = vsub.s32 %v437, %v656
    %v658 = vrot.slane %v654, %v657
    %v659 = vpack.c.b16 %v658, %v658
    %v661 = vsel %vm485, %v659, 0
    %vm663 = vcmask 1043456
    %v665 = vsel %vm663, %v78, 0
    %667 = vmatprep.subr.bf16.mxu0 0
    %668 = vmatpush1.bf16.msra.mxu0 %v665
    %669 = vmatprep.subr.bf16.mxu0 0
    %670 = vmatpush1.bf16.msra.mxu0 0
    %671 = vmatprep.subr.bf16.mxu0 0
    %672 = vmatpush1.bf16.msra.mxu0 0
    %673 = vmatprep.subr.bf16.mxu0 0
    %674 = vmatpush1.bf16.msra.mxu0 0
    %675 = vmatprep.subr.bf16.mxu0 0
    %676 = vmatpush1.bf16.msra.mxu0 0
    %677 = vmatprep.subr.bf16.mxu0 0
    %678 = vmatpush1.bf16.msra.mxu0 0
    %679 = vmatprep.subr.bf16.mxu0 0
    %680 = vmatpush1.bf16.msra.mxu0 0
    %681 = vmatprep.subr.bf16.mxu0 0
    %682 = vmatpush1.bf16.msra.mxu0 0
    %683 = vmatprep.subr.bf16.mxu0 0
    %684 = vmatpush1.bf16.msra.mxu0 0
    %685 = vmatprep.subr.bf16.mxu0 0
    %686 = vmatpush1.bf16.msra.mxu0 0
    %687 = vmatprep.subr.bf16.mxu0 0
    %688 = vmatpush1.bf16.msra.mxu0 0
    %689 = vmatprep.subr.bf16.mxu0 0
    %690 = vmatpush1.bf16.msra.mxu0 0
    %691 = vmatprep.subr.bf16.mxu0 0
    %692 = vmatpush1.bf16.msra.mxu0 0
    %693 = vmatprep.subr.bf16.mxu0 0
    %694 = vmatpush1.bf16.msra.mxu0 0
    %695 = vmatprep.subr.bf16.mxu0 0
    %696 = vmatpush1.bf16.msra.mxu0 0
    %697 = vmatprep.subr.bf16.mxu0 0
    %698 = vmatpush1.bf16.msra.mxu0 0
    %699 = vmatprep.mubr.bf16.mxu0 0
    %700 = vmatmul.mubr.bf16.gmra.mrb[0].mxu0 %v661
    %v701 = vpop.f32.mrb[0].mxu0
    %v702 = vadd.f32 0.0, %v701
    %v703 = vpop.f32.mrb[0].mxu0
    %v704 = vpop.f32.mrb[0].mxu0
    %v705 = vpop.f32.mrb[0].mxu0
    %706 = vdwg.mxu0
    %v708 = vunpack.c.l.b16 %v643
    %709 = vset.pattern.permute.xlu0 0
    %710 = vperm.xlu0 %709, %v708
    %v711 = vpop.permute.xlu0 %710
    %v712 = vlaneseq
    %v713 = vshrl.u32 %v712, 7
    %v714 = vsub.s32 %v437, %v713
    %v715 = vrot.slane %v711, %v714
    %v716 = vpack.c.b16 %v715, %v715
    %v718 = vsel %vm485, %v716, 0
    %v721 = vsel %vm663, %v79, 0
    %723 = vmatprep.subr.bf16.mxu0 0
    %724 = vmatpush1.bf16.msra.mxu0 %v721
    %725 = vmatprep.subr.bf16.mxu0 0
    %726 = vmatpush1.bf16.msra.mxu0 0
    %727 = vmatprep.subr.bf16.mxu0 0
    %728 = vmatpush1.bf16.msra.mxu0 0
    %729 = vmatprep.subr.bf16.mxu0 0
    %730 = vmatpush1.bf16.msra.mxu0 0
    %731 = vmatprep.subr.bf16.mxu0 0
    %732 = vmatpush1.bf16.msra.mxu0 0
    %733 = vmatprep.subr.bf16.mxu0 0
    %734 = vmatpush1.bf16.msra.mxu0 0
    %735 = vmatprep.subr.bf16.mxu0 0
    %736 = vmatpush1.bf16.msra.mxu0 0
    %737 = vmatprep.subr.bf16.mxu0 0
    %738 = vmatpush1.bf16.msra.mxu0 0
    %739 = vmatprep.subr.bf16.mxu0 0
    %740 = vmatpush1.bf16.msra.mxu0 0
    %741 = vmatprep.subr.bf16.mxu0 0
    %742 = vmatpush1.bf16.msra.mxu0 0
    %743 = vmatprep.subr.bf16.mxu0 0
    %744 = vmatpush1.bf16.msra.mxu0 0
    %745 = vmatprep.subr.bf16.mxu0 0
    %746 = vmatpush1.bf16.msra.mxu0 0
    %747 = vmatprep.subr.bf16.mxu0 0
    %748 = vmatpush1.bf16.msra.mxu0 0
    %749 = vmatprep.subr.bf16.mxu0 0
    %750 = vmatpush1.bf16.msra.mxu0 0
    %751 = vmatprep.subr.bf16.mxu0 0
    %752 = vmatpush1.bf16.msra.mxu0 0
    %753 = vmatprep.subr.bf16.mxu0 0
    %754 = vmatpush1.bf16.msra.mxu0 0
    %755 = vmatprep.mubr.bf16.mxu0 0
    %756 = vmatmul.mubr.bf16.gmra.mrb[0].mxu0 %v718
    %v757 = vpop.f32.mrb[0].mxu0
    %v758 = vadd.f32 0.0, %v757
    %v759 = vpop.f32.mrb[0].mxu0
    %v760 = vpop.f32.mrb[0].mxu0
    %v761 = vpop.f32.mrb[0].mxu0
    %762 = vdwg.mxu0
    %v764 = vunpack.c.l.b16 %v644
    %765 = vset.pattern.permute.xlu0 0
    %766 = vperm.xlu0 %765, %v764
    %v767 = vpop.permute.xlu0 %766
    %v768 = vlaneseq
    %v769 = vshrl.u32 %v768, 7
    %v770 = vsub.s32 %v437, %v769
    %v771 = vrot.slane %v767, %v770
    %v772 = vpack.c.b16 %v771, %v771
    %v774 = vsel %vm485, %v772, 0
    %v777 = vsel %vm663, %v80, 0
    %779 = vmatprep.subr.bf16.mxu0 0
    %780 = vmatpush1.bf16.msra.mxu0 %v777
    %781 = vmatprep.subr.bf16.mxu0 0
    %782 = vmatpush1.bf16.msra.mxu0 0
    %783 = vmatprep.subr.bf16.mxu0 0
    %784 = vmatpush1.bf16.msra.mxu0 0
    %785 = vmatprep.subr.bf16.mxu0 0
    %786 = vmatpush1.bf16.msra.mxu0 0
    %787 = vmatprep.subr.bf16.mxu0 0
    %788 = vmatpush1.bf16.msra.mxu0 0
    %789 = vmatprep.subr.bf16.mxu0 0
    %790 = vmatpush1.bf16.msra.mxu0 0
    %791 = vmatprep.subr.bf16.mxu0 0
    %792 = vmatpush1.bf16.msra.mxu0 0
    %793 = vmatprep.subr.bf16.mxu0 0
    %794 = vmatpush1.bf16.msra.mxu0 0
    %795 = vmatprep.subr.bf16.mxu0 0
    %796 = vmatpush1.bf16.msra.mxu0 0
    %797 = vmatprep.subr.bf16.mxu0 0
    %798 = vmatpush1.bf16.msra.mxu0 0
    %799 = vmatprep.subr.bf16.mxu0 0
    %800 = vmatpush1.bf16.msra.mxu0 0
    %801 = vmatprep.subr.bf16.mxu0 0
    %802 = vmatpush1.bf16.msra.mxu0 0
    %803 = vmatprep.subr.bf16.mxu0 0
    %804 = vmatpush1.bf16.msra.mxu0 0
    %805 = vmatprep.subr.bf16.mxu0 0
    %806 = vmatpush1.bf16.msra.mxu0 0
    %807 = vmatprep.subr.bf16.mxu0 0
    %808 = vmatpush1.bf16.msra.mxu0 0
    %809 = vmatprep.subr.bf16.mxu0 0
    %810 = vmatpush1.bf16.msra.mxu0 0
    %811 = vmatprep.mubr.bf16.mxu0 0
    %812 = vmatmul.mubr.bf16.gmra.mrb[0].mxu0 %v774
    %v813 = vpop.f32.mrb[0].mxu0
    %v814 = vadd.f32 0.0, %v813
    %v815 = vpop.f32.mrb[0].mxu0
    %v816 = vpop.f32.mrb[0].mxu0
    %v817 = vpop.f32.mrb[0].mxu0
    %818 = vdwg.mxu0
    %v820 = vunpack.c.l.b16 %v645
    %821 = vset.pattern.permute.xlu0 0
    %822 = vperm.xlu0 %821, %v820
    %v823 = vpop.permute.xlu0 %822
    %v824 = vlaneseq
    %v825 = vshrl.u32 %v824, 7
    %v826 = vsub.s32 %v437, %v825
    %v827 = vrot.slane %v823, %v826
    %v828 = vpack.c.b16 %v827, %v827
    %v830 = vsel %vm485, %v828, 0
    %v833 = vsel %vm663, %v81, 0
    %835 = vmatprep.subr.bf16.mxu0 0
    %836 = vmatpush1.bf16.msra.mxu0 %v833
    %837 = vmatprep.subr.bf16.mxu0 0
    %838 = vmatpush1.bf16.msra.mxu0 0
    %839 = vmatprep.subr.bf16.mxu0 0
    %840 = vmatpush1.bf16.msra.mxu0 0
    %841 = vmatprep.subr.bf16.mxu0 0
    %842 = vmatpush1.bf16.msra.mxu0 0
    %843 = vmatprep.subr.bf16.mxu0 0
    %844 = vmatpush1.bf16.msra.mxu0 0
    %845 = vmatprep.subr.bf16.mxu0 0
    %846 = vmatpush1.bf16.msra.mxu0 0
    %847 = vmatprep.subr.bf16.mxu0 0
    %848 = vmatpush1.bf16.msra.mxu0 0
    %849 = vmatprep.subr.bf16.mxu0 0
    %850 = vmatpush1.bf16.msra.mxu0 0
    %851 = vmatprep.subr.bf16.mxu0 0
    %852 = vmatpush1.bf16.msra.mxu0 0
    %853 = vmatprep.subr.bf16.mxu0 0
    %854 = vmatpush1.bf16.msra.mxu0 0
    %855 = vmatprep.subr.bf16.mxu0 0
    %856 = vmatpush1.bf16.msra.mxu0 0
    %857 = vmatprep.subr.bf16.mxu0 0
    %858 = vmatpush1.bf16.msra.mxu0 0
    %859 = vmatprep.subr.bf16.mxu0 0
    %860 = vmatpush1.bf16.msra.mxu0 0
    %861 = vmatprep.subr.bf16.mxu0 0
    %862 = vmatpush1.bf16.msra.mxu0 0
    %863 = vmatprep.subr.bf16.mxu0 0
    %864 = vmatpush1.bf16.msra.mxu0 0
    %865 = vmatprep.subr.bf16.mxu0 0
    %866 = vmatpush1.bf16.msra.mxu0 0
    %867 = vmatprep.mubr.bf16.mxu0 0
    %868 = vmatmul.mubr.bf16.gmra.mrb[0].mxu0 %v830
    %v869 = vpop.f32.mrb[0].mxu0
    %v870 = vadd.f32 0.0, %v869
    %v871 = vpop.f32.mrb[0].mxu0
    %v872 = vpop.f32.mrb[0].mxu0
    %v873 = vpop.f32.mrb[0].mxu0
    %874 = vdwg.mxu0
    %v876 = vunpack.c.l.b16 %v646
    %877 = vset.pattern.permute.xlu0 0
    %878 = vperm.xlu0 %877, %v876
    %v879 = vpop.permute.xlu0 %878
    %v880 = vlaneseq
    %v881 = vshrl.u32 %v880, 7
    %v882 = vsub.s32 %v437, %v881
    %v883 = vrot.slane %v879, %v882
    %v884 = vpack.c.b16 %v883, %v883
    %v886 = vsel %vm485, %v884, 0
    %v889 = vsel %vm663, %v82, 0
    %891 = vmatprep.subr.bf16.mxu0 0
    %892 = vmatpush1.bf16.msra.mxu0 %v889
    %893 = vmatprep.subr.bf16.mxu0 0
    %894 = vmatpush1.bf16.msra.mxu0 0
    %895 = vmatprep.subr.bf16.mxu0 0
    %896 = vmatpush1.bf16.msra.mxu0 0
    %897 = vmatprep.subr.bf16.mxu0 0
    %898 = vmatpush1.bf16.msra.mxu0 0
    %899 = vmatprep.subr.bf16.mxu0 0
    %900 = vmatpush1.bf16.msra.mxu0 0
    %901 = vmatprep.subr.bf16.mxu0 0
    %902 = vmatpush1.bf16.msra.mxu0 0
    %903 = vmatprep.subr.bf16.mxu0 0
    %904 = vmatpush1.bf16.msra.mxu0 0
    %905 = vmatprep.subr.bf16.mxu0 0
    %906 = vmatpush1.bf16.msra.mxu0 0
    %907 = vmatprep.subr.bf16.mxu0 0
    %908 = vmatpush1.bf16.msra.mxu0 0
    %909 = vmatprep.subr.bf16.mxu0 0
    %910 = vmatpush1.bf16.msra.mxu0 0
    %911 = vmatprep.subr.bf16.mxu0 0
    %912 = vmatpush1.bf16.msra.mxu0 0
    %913 = vmatprep.subr.bf16.mxu0 0
    %914 = vmatpush1.bf16.msra.mxu0 0
    %915 = vmatprep.subr.bf16.mxu0 0
    %916 = vmatpush1.bf16.msra.mxu0 0
    %917 = vmatprep.subr.bf16.mxu0 0
    %918 = vmatpush1.bf16.msra.mxu0 0
    %919 = vmatprep.subr.bf16.mxu0 0
    %920 = vmatpush1.bf16.msra.mxu0 0
    %921 = vmatprep.subr.bf16.mxu0 0
    %922 = vmatpush1.bf16.msra.mxu0 0
    %923 = vmatprep.mubr.bf16.mxu0 0
    %924 = vmatmul.mubr.bf16.gmra.mrb[0].mxu0 %v886
    %v925 = vpop.f32.mrb[0].mxu0
    %v926 = vadd.f32 0.0, %v925
    %v927 = vpop.f32.mrb[0].mxu0
    %v928 = vpop.f32.mrb[0].mxu0
    %v929 = vpop.f32.mrb[0].mxu0
    %930 = vdwg.mxu0
    %v932 = vunpack.c.l.b16 %v647
    %933 = vset.pattern.permute.xlu0 0
    %934 = vperm.xlu0 %933, %v932
    %v935 = vpop.permute.xlu0 %934
    %v936 = vlaneseq
    %v937 = vshrl.u32 %v936, 7
    %v938 = vsub.s32 %v437, %v937
    %v939 = vrot.slane %v935, %v938
    %v940 = vpack.c.b16 %v939, %v939
    %v942 = vsel %vm485, %v940, 0
    %v945 = vsel %vm663, %v83, 0
    %947 = vmatprep.subr.bf16.mxu0 0
    %948 = vmatpush1.bf16.msra.mxu0 %v945
    %949 = vmatprep.subr.bf16.mxu0 0
    %950 = vmatpush1.bf16.msra.mxu0 0
    %951 = vmatprep.subr.bf16.mxu0 0
    %952 = vmatpush1.bf16.msra.mxu0 0
    %953 = vmatprep.subr.bf16.mxu0 0
    %954 = vmatpush1.bf16.msra.mxu0 0
    %955 = vmatprep.subr.bf16.mxu0 0
    %956 = vmatpush1.bf16.msra.mxu0 0
    %957 = vmatprep.subr.bf16.mxu0 0
    %958 = vmatpush1.bf16.msra.mxu0 0
    %959 = vmatprep.subr.bf16.mxu0 0
    %960 = vmatpush1.bf16.msra.mxu0 0
    %961 = vmatprep.subr.bf16.mxu0 0
    %962 = vmatpush1.bf16.msra.mxu0 0
    %963 = vmatprep.subr.bf16.mxu0 0
    %964 = vmatpush1.bf16.msra.mxu0 0
    %965 = vmatprep.subr.bf16.mxu0 0
    %966 = vmatpush1.bf16.msra.mxu0 0
    %967 = vmatprep.subr.bf16.mxu0 0
    %968 = vmatpush1.bf16.msra.mxu0 0
    %969 = vmatprep.subr.bf16.mxu0 0
    %970 = vmatpush1.bf16.msra.mxu0 0
    %971 = vmatprep.subr.bf16.mxu0 0
    %972 = vmatpush1.bf16.msra.mxu0 0
    %973 = vmatprep.subr.bf16.mxu0 0
    %974 = vmatpush1.bf16.msra.mxu0 0
    %975 = vmatprep.subr.bf16.mxu0 0
    %976 = vmatpush1.bf16.msra.mxu0 0
    %977 = vmatprep.subr.bf16.mxu0 0
    %978 = vmatpush1.bf16.msra.mxu0 0
    %979 = vmatprep.mubr.bf16.mxu0 0
    %980 = vmatmul.mubr.bf16.gmra.mrb[0].mxu0 %v942
    %v981 = vpop.f32.mrb[0].mxu0
    %v982 = vadd.f32 0.0, %v981
    %v983 = vpop.f32.mrb[0].mxu0
    %v984 = vpop.f32.mrb[0].mxu0
    %v985 = vpop.f32.mrb[0].mxu0
    %986 = vdwg.mxu0
    %v988 = vunpack.c.l.b16 %v648
    %989 = vset.pattern.permute.xlu0 0
    %990 = vperm.xlu0 %989, %v988
    %v991 = vpop.permute.xlu0 %990
    %v992 = vlaneseq
    %v993 = vshrl.u32 %v992, 7
    %v994 = vsub.s32 %v437, %v993
    %v995 = vrot.slane %v991, %v994
    %v996 = vpack.c.b16 %v995, %v995
    %v998 = vsel %vm485, %v996, 0
    %v1001 = vsel %vm663, %v84, 0
    %1003 = vmatprep.subr.bf16.mxu0 0
    %1004 = vmatpush1.bf16.msra.mxu0 %v1001
    %1005 = vmatprep.subr.bf16.mxu0 0
    %1006 = vmatpush1.bf16.msra.mxu0 0
    %1007 = vmatprep.subr.bf16.mxu0 0
    %1008 = vmatpush1.bf16.msra.mxu0 0
    %1009 = vmatprep.subr.bf16.mxu0 0
    %1010 = vmatpush1.bf16.msra.mxu0 0
    %1011 = vmatprep.subr.bf16.mxu0 0
    %1012 = vmatpush1.bf16.msra.mxu0 0
    %1013 = vmatprep.subr.bf16.mxu0 0
    %1014 = vmatpush1.bf16.msra.mxu0 0
    %1015 = vmatprep.subr.bf16.mxu0 0
    %1016 = vmatpush1.bf16.msra.mxu0 0
    %1017 = vmatprep.subr.bf16.mxu0 0
    %1018 = vmatpush1.bf16.msra.mxu0 0
    %1019 = vmatprep.subr.bf16.mxu0 0
    %1020 = vmatpush1.bf16.msra.mxu0 0
    %1021 = vmatprep.subr.bf16.mxu0 0
    %1022 = vmatpush1.bf16.msra.mxu0 0
    %1023 = vmatprep.subr.bf16.mxu0 0
    %1024 = vmatpush1.bf16.msra.mxu0 0
    %1025 = vmatprep.subr.bf16.mxu0 0
    %1026 = vmatpush1.bf16.msra.mxu0 0
    %1027 = vmatprep.subr.bf16.mxu0 0
    %1028 = vmatpush1.bf16.msra.mxu0 0
    %1029 = vmatprep.subr.bf16.mxu0 0
    %1030 = vmatpush1.bf16.msra.mxu0 0
    %1031 = vmatprep.subr.bf16.mxu0 0
    %1032 = vmatpush1.bf16.msra.mxu0 0
    %1033 = vmatprep.subr.bf16.mxu0 0
    %1034 = vmatpush1.bf16.msra.mxu0 0
    %1035 = vmatprep.mubr.bf16.mxu0 0
    %1036 = vmatmul.mubr.bf16.gmra.mrb[0].mxu0 %v998
    %v1037 = vpop.f32.mrb[0].mxu0
    %v1038 = vadd.f32 0.0, %v1037
    %v1039 = vpop.f32.mrb[0].mxu0
    %v1040 = vpop.f32.mrb[0].mxu0
    %v1041 = vpop.f32.mrb[0].mxu0
    %1042 = vdwg.mxu0
    %v1044 = vunpack.c.l.b16 %v649
    %1045 = vset.pattern.permute.xlu0 0
    %1046 = vperm.xlu0 %1045, %v1044
    %v1047 = vpop.permute.xlu0 %1046
    %v1048 = vlaneseq
    %v1049 = vshrl.u32 %v1048, 7
    %v1050 = vsub.s32 %v437, %v1049
    %v1051 = vrot.slane %v1047, %v1050
    %v1052 = vpack.c.b16 %v1051, %v1051
    %v1054 = vsel %vm485, %v1052, 0
    %v1057 = vsel %vm663, %v85, 0
    %1059 = vmatprep.subr.bf16.mxu0 0
    %1060 = vmatpush1.bf16.msra.mxu0 %v1057
    %1061 = vmatprep.subr.bf16.mxu0 0
    %1062 = vmatpush1.bf16.msra.mxu0 0
    %1063 = vmatprep.subr.bf16.mxu0 0
    %1064 = vmatpush1.bf16.msra.mxu0 0
    %1065 = vmatprep.subr.bf16.mxu0 0
    %1066 = vmatpush1.bf16.msra.mxu0 0
    %1067 = vmatprep.subr.bf16.mxu0 0
    %1068 = vmatpush1.bf16.msra.mxu0 0
    %1069 = vmatprep.subr.bf16.mxu0 0
    %1070 = vmatpush1.bf16.msra.mxu0 0
    %1071 = vmatprep.subr.bf16.mxu0 0
    %1072 = vmatpush1.bf16.msra.mxu0 0
    %1073 = vmatprep.subr.bf16.mxu0 0
    %1074 = vmatpush1.bf16.msra.mxu0 0
    %1075 = vmatprep.subr.bf16.mxu0 0
    %1076 = vmatpush1.bf16.msra.mxu0 0
    %1077 = vmatprep.subr.bf16.mxu0 0
    %1078 = vmatpush1.bf16.msra.mxu0 0
    %1079 = vmatprep.subr.bf16.mxu0 0
    %1080 = vmatpush1.bf16.msra.mxu0 0
    %1081 = vmatprep.subr.bf16.mxu0 0
    %1082 = vmatpush1.bf16.msra.mxu0 0
    %1083 = vmatprep.subr.bf16.mxu0 0
    %1084 = vmatpush1.bf16.msra.mxu0 0
    %1085 = vmatprep.subr.bf16.mxu0 0
    %1086 = vmatpush1.bf16.msra.mxu0 0
    %1087 = vmatprep.subr.bf16.mxu0 0
    %1088 = vmatpush1.bf16.msra.mxu0 0
    %1089 = vmatprep.subr.bf16.mxu0 0
    %1090 = vmatpush1.bf16.msra.mxu0 0
    %1091 = vmatprep.mubr.bf16.mxu0 0
    %1092 = vmatmul.mubr.bf16.gmra.mrb[0].mxu0 %v1054
    %v1093 = vpop.f32.mrb[0].mxu0
    %v1094 = vadd.f32 0.0, %v1093
    %v1095 = vpop.f32.mrb[0].mxu0
    %v1096 = vpop.f32.mrb[0].mxu0
    %v1097 = vpop.f32.mrb[0].mxu0
    %1098 = vdwg.mxu0
    %v1099 = vld [vmem:[#allocation10] sm:$0xff]
    %1101 = vset.pattern.permute.xlu0 0
    %1102 = vperm.xlu0 %1101, %v492
    %v1103 = vpop.permute.xlu0 %1102
    %v1105 = vmul.f32 %v1103, %v1099
    %v1114 = vrot.slane %v758, 7
    %v1115 = vsel %vm470, %v1114, %v702
    %v1116 = vrot.slane %v814, 6
    %v1117 = vsel %vm472, %v1116, %v1115
    %v1118 = vrot.slane %v870, 5
    %v1119 = vsel %vm474, %v1118, %v1117
    %v1120 = vrot.slane %v926, 4
    %v1121 = vsel %vm476, %v1120, %v1119
    %v1122 = vrot.slane %v982, 3
    %v1123 = vsel %vm478, %v1122, %v1121
    %v1124 = vrot.slane %v1038, 2
    %v1125 = vsel %vm480, %v1124, %v1123
    %v1126 = vrot.slane %v1094, 1
    %v1127 = vsel %vm482, %v1126, %v1125
    %v1129 = vadd.f32 %v1105, %v1127
    %1130 = vst.msk [vmem:[#allocation10] sm:$0xff] %vm129, %v1129
    // Predicated region
    $region38: #{tpu_custom_call.1} parent=1 // pred_check
      %p1131 = pneg %p61
    $region39: #{tpu_custom_call.1} parent=1 // pred_check_branch
      %1133 = sbr.rel (%p1131) target = $region41
    $region40: #{tpu_custom_call.1} parent=1 // pred_region
      %v1134 = vld [vmem:[#allocation10] sm:$0xff]
      %v1135 = vld [vmem:[#allocation3] sm:$0xff]
      %v1136 = vrcp.pop %v1135
      %1138 = vset.pattern.permute.xlu0 0
      %1139 = vperm.xlu0 %1138, %v1136
      %v1140 = vpop.permute.xlu0 %1139
      %v1142 = vmul.f32 %v1134, %v1140
      %1143 = vst.msk [vmem:[#allocation10] sm:$0xff] %vm129, %v1142
    $region41: #{tpu_custom_call.1} parent=1 // pred_fallthru
      _
    // Predicated region
    $region42: #{tpu_custom_call.1} parent=1 // pred_check
      _
    $region43: #{tpu_custom_call.1} parent=1 // pred_check_branch
      %1145 = sbr.rel (0) target = $region45
    $region44: #{tpu_custom_call.1} parent=1 // pred_region
      %s1147 = ssub.s32 128, 128
      %1148 = vsyncadd [#allocation6], %s1147
      %s1150 = sshll.u32 [#allocation10], 4
      %s1151 = int_to_ptr.vmem [resolvable:$true] %s1150
      %1153 = dma.vmem_to_hbm [thread:$0]  %s1151, 128, %s5, [#allocation6]
    $region45: #{tpu_custom_call.1} parent=1 // pred_fallthru
      _
    // Predicated region
    $region46: #{tpu_custom_call.1} parent=1 // pred_check
      _
    $region47: #{tpu_custom_call.1} parent=1 // pred_check_branch
      %1155 = sbr.rel (0) target = $region49
    $region48: #{tpu_custom_call.1} parent=1 // pred_region
      %1156 = dma.done [#allocation6], 128
    $region49: #{tpu_custom_call.1} parent=1 // pred_fallthru
      _
    %1157 = vsyncpa [#allocation5], 1
    %1158 = vsyncpa [#allocation8], 1
    %1159 = vsyncpa [#allocation6], 1

</llo_original>
